<compile_context>
chip_gen: v5e
topology: v5e:2x2
jax: 0.10.0
libtpu: 0.0.40
codegen_flags: <defaults>
</compile_context>

<pallas_src>
import functools

import jax
import jax.numpy as jnp
from jax import lax
from jax.experimental import pallas as pl
from jax.experimental.pallas import tpu as pltpu


def _backbone_kernel(x_ref, w1_ref, b1_ref, w2_ref, b2_ref, o_ref, *, H, W):
    """Fused 2-layer conv3x3/ReLU backbone; Nb images per grid step.

    x_ref : (Nb, H*W, 9*Cin)  conv1 im2col patches (precomputed in wrapper)
    w1_ref: (9*Cin, C1)       conv1 weights, im2col layout
    b1_ref: (1, C1)
    w2_ref: (9*C1, Cout)      conv2 weights, im2col layout
    b2_ref: (1, Cout)
    o_ref : (Nb, Cout, H*W)   lane-dense output (last dim = H*W)
    """
    Nb = x_ref.shape[0]
    K1 = x_ref.shape[2]
    C1 = w1_ref.shape[1]
    Cout = w2_ref.shape[1]
    HW = H * W

    # ---- conv1: single fused MXU matmul over all taps and all Nb images ----
    p1 = x_ref[...].reshape(Nb * HW, K1)
    h = jnp.dot(p1, w1_ref[...], preferred_element_type=jnp.float32)
    h = jnp.maximum(h + b1_ref[...], 0.0).reshape(Nb, H, W, C1)

    # ---- conv2: im2col in registers (zero border via concat, no scratch) ---
    zrow = jnp.zeros((Nb, 1, W, C1), jnp.float32)
    zcol = jnp.zeros((Nb, H + 2, 1, C1), jnp.float32)
    h_pad = jnp.concatenate([zrow, h, zrow], axis=1)
    h_pad = jnp.concatenate([zcol, h_pad, zcol], axis=2)
    p2 = jnp.concatenate(
        [h_pad[:, kh:kh + H, kw:kw + W, :]
         for kh in range(3) for kw in range(3)], axis=-1)      # (Nb,H,W,9*C1)
    p2 = p2.reshape(Nb * HW, 9 * C1)
    out = jnp.dot(p2, w2_ref[...], preferred_element_type=jnp.float32)
    out = jnp.maximum(out + b2_ref[...], 0.0)                   # (Nb*HW, Cout)

    # ---- lane-dense store: (Nb, Cout, H*W) -> unmasked 128-wide vst --------
    out = jnp.transpose(out.reshape(Nb, HW, Cout), (0, 2, 1))
    o_ref[...] = out.astype(o_ref.dtype)


def _pick_block_n(n, per_image_bytes, budget_bytes=8 << 20):
    """Largest divisor of n whose per-step VMEM footprint fits the budget."""
    nb = max(1, min(n, budget_bytes // max(per_image_bytes, 1)))
    while n % nb:
        nb -= 1
    return nb


def protonet_forward(x_nchw, w1, b1, w2, b2, *, block_n=None):
    """x_nchw: (N, Cin, T, V) float32.  Returns (N, Cout, T, V) float32."""
    N, Cin, H, W = x_nchw.shape
    C1 = w1.shape[3]
    Cout = w2.shape[3]
    HW = H * W

    # NCHW -> NHWC, SAME pad, conv1 im2col done in XLA so the kernel sees a
    # lane-contiguous (N, H*W, 9*Cin) operand instead of relayouting in-kernel.
    x_nhwc = jnp.transpose(x_nchw, (0, 2, 3, 1))
    x_pad = jnp.pad(x_nhwc, ((0, 0), (1, 1), (1, 1), (0, 0)))
    p1 = jnp.concatenate(
        [x_pad[:, kh:kh + H, kw:kw + W, :]
         for kh in range(3) for kw in range(3)], axis=-1)       # (N,H,W,9*Cin)
    p1 = p1.reshape(N, HW, 9 * Cin)

    w1_flat = w1.reshape(9 * Cin, C1)       # (kh, kw, cin) row order
    w2_flat = w2.reshape(9 * C1, Cout)      # (kh, kw, c1) row order
    b1_2d = b1.reshape(1, C1)
    b2_2d = b2.reshape(1, Cout)

    if block_n is None:
        # Rough per-image live-VMEM estimate: input patches + output tile +
        # padded activation + conv2 im2col matrix (all f32).
        per_img = 4 * (HW * 9 * Cin + Cout * HW
                       + (H + 2) * (W + 2) * C1 + HW * 9 * C1)
        block_n = _pick_block_n(N, per_img)
    grid = (N // block_n,)

    kernel = functools.partial(_backbone_kernel, H=H, W=W)

    out = pl.pallas_call(
        kernel,
        out_shape=jax.ShapeDtypeStruct((N, Cout, HW), jnp.float32),
        grid_spec=pltpu.PrefetchScalarGridSpec(
            num_scalar_prefetch=0,
            grid=grid,
            in_specs=[
                pl.BlockSpec((block_n, HW, 9 * Cin), lambda i: (i, 0, 0)),
                pl.BlockSpec((9 * Cin, C1), lambda i: (0, 0)),
                pl.BlockSpec((1, C1), lambda i: (0, 0)),
                pl.BlockSpec((9 * C1, Cout), lambda i: (0, 0)),
                pl.BlockSpec((1, Cout), lambda i: (0, 0)),
            ],
            out_specs=pl.BlockSpec((block_n, Cout, HW), lambda i: (i, 0, 0)),
        ),
        compiler_params=pltpu.CompilerParams(
            dimension_semantics=("parallel",)),
    )(p1, w1_flat, b1_2d, w2_flat, b2_2d)

    # Kernel output is already channel-major (N, Cout, T*V): final NCHW view
    # is a free reshape, no HBM transpose.
    return out.reshape(N, Cout, H, W)


def _reference_forward(x_nchw, w1, b1, w2, b2):
    """Plain-JAX reference (NHWC conv) for correctness check."""
    x = jnp.transpose(x_nchw, (0, 2, 3, 1))
    dn = ("NHWC", "HWIO", "NHWC")
    h = lax.conv_general_dilated(x, w1, (1, 1), "SAME", dimension_numbers=dn)
    h = jnp.maximum(h + b1, 0.0)
    o = lax.conv_general_dilated(h, w2, (1, 1), "SAME", dimension_numbers=dn)
    o = jnp.maximum(o + b2, 0.0)
    return jnp.transpose(o, (0, 3, 1, 2))


if __name__ == "__main__":
    # Small shapes consistent with ProtoNet's (n, c, t, v) input convention.
    N, Cin, T, V = 2, 4, 16, 16
    C1, Cout = 32, 32

    key = jax.random.PRNGKey(0)
    kx, k1, k2, k3, k4 = jax.random.split(key, 5)

    x = jax.random.normal(kx, (N, Cin, T, V), dtype=jnp.float32)
    w1 = jax.random.normal(k1, (3, 3, Cin, C1), dtype=jnp.float32) * 0.1
    b1 = jax.random.normal(k2, (C1,), dtype=jnp.float32) * 0.1
    w2 = jax.random.normal(k3, (3, 3, C1, Cout), dtype=jnp.float32) * 0.1
    b2 = jax.random.normal(k4, (Cout,), dtype=jnp.float32) * 0.1

    out = jax.jit(protonet_forward)(x, w1, b1, w2, b2)
    out = jax.block_until_ready(out)

    ref = _reference_forward(x, w1, b1, w2, b2)
    assert out.shape == (N, Cout, T, V), out.shape
    assert jnp.allclose(out, ref, atol=1e-3, rtol=1e-3), "mismatch vs reference"

    print("KERNEL_OK")
</pallas_src>

<mosaic_0001>
module attributes {stable_mosaic.version = 11 : i64} {
  func.func @_backbone_kernel(%arg0: i32, %arg1: memref<2x256x36xf32, #tpu.memory_space<vmem>>, %arg2: memref<36x32xf32, #tpu.memory_space<vmem>>, %arg3: memref<1x32xf32, #tpu.memory_space<vmem>>, %arg4: memref<288x32xf32, #tpu.memory_space<vmem>>, %arg5: memref<1x32xf32, #tpu.memory_space<vmem>>, %arg6: memref<2x32x256xf32, #tpu.memory_space<vmem>>) attributes {dimension_semantics = [#tpu.dimension_semantics<parallel>], iteration_bounds = array<i64: 1>, scalar_prefetch = 0 : i64, scratch_operands = 0 : i64, tpu.core_type = #tpu.core_type<tc>, window_params = [{transform_indices = @transform_0, window_bounds = array<i64: 2, 256, 36>}, {pipeline_mode = #tpu.pipeline_mode<synchronous>, transform_indices = @transform_1, window_bounds = array<i64: 36, 32>}, {pipeline_mode = #tpu.pipeline_mode<synchronous>, transform_indices = @transform_2, window_bounds = array<i64: 1, 32>}, {pipeline_mode = #tpu.pipeline_mode<synchronous>, transform_indices = @transform_3, window_bounds = array<i64: 288, 32>}, {pipeline_mode = #tpu.pipeline_mode<synchronous>, transform_indices = @transform_4, window_bounds = array<i64: 1, 32>}, {transform_indices = @transform_5, window_bounds = array<i64: 2, 32, 256>}]} {
    %c0 = arith.constant 0 : index
    %c0_0 = arith.constant 0 : index
    %c0_1 = arith.constant 0 : index
    %0 = vector.load %arg1[%c0, %c0_0, %c0_1] : memref<2x256x36xf32, #tpu.memory_space<vmem>>, vector<2x256x36xf32>
    %1 = vector.shape_cast %0 : vector<2x256x36xf32> to vector<512x36xf32>
    %c0_2 = arith.constant 0 : index
    %c0_3 = arith.constant 0 : index
    %2 = vector.load %arg2[%c0_2, %c0_3] : memref<36x32xf32, #tpu.memory_space<vmem>>, vector<36x32xf32>
    %cst = arith.constant dense<0.000000e+00> : vector<512x32xf32>
    %3 = tpu.matmul %1, %2, %cst {dimension_numbers = #tpu.dot_dimension_numbers<[1], [0], [0], [1], [0, 0, 1, 1], [], []>} : vector<512x36xf32>, vector<36x32xf32>, vector<512x32xf32> -> vector<512x32xf32>
    %c0_4 = arith.constant 0 : index
    %c0_5 = arith.constant 0 : index
    %4 = vector.load %arg3[%c0_4, %c0_5] : memref<1x32xf32, #tpu.memory_space<vmem>>, vector<1x32xf32>
    %5 = vector.broadcast %4 : vector<1x32xf32> to vector<512x32xf32>
    %6 = arith.addf %3, %5 : vector<512x32xf32>
    %cst_6 = arith.constant 0.000000e+00 : f32
    %7 = vector.broadcast %cst_6 : f32 to vector<512x32xf32>
    %8 = arith.maximumf %6, %7 : vector<512x32xf32>
    %9 = vector.shape_cast %8 : vector<512x32xf32> to vector<2x16x16x32xf32>
    %cst_7 = arith.constant 0.000000e+00 : f32
    %10 = vector.broadcast %cst_7 : f32 to vector<2x1x16x32xf32>
    %cst_8 = arith.constant 0.000000e+00 : f32
    %11 = vector.broadcast %cst_8 : f32 to vector<2x18x1x32xf32>
    %12 = tpu.concatenate %10, %9, %10 in 1 : vector<2x1x16x32xf32>, vector<2x16x16x32xf32>, vector<2x1x16x32xf32> -> vector<2x18x16x32xf32>
    %13 = tpu.concatenate %11, %12, %11 in 2 : vector<2x18x1x32xf32>, vector<2x18x16x32xf32>, vector<2x18x1x32xf32> -> vector<2x18x18x32xf32>
    %14 = vector.extract_strided_slice %13 {offsets = [0, 0, 0, 0], sizes = [2, 16, 16, 32], strides = [1, 1, 1, 1]} : vector<2x18x18x32xf32> to vector<2x16x16x32xf32>
    %15 = vector.extract_strided_slice %13 {offsets = [0, 0, 1, 0], sizes = [2, 16, 16, 32], strides = [1, 1, 1, 1]} : vector<2x18x18x32xf32> to vector<2x16x16x32xf32>
    %16 = vector.extract_strided_slice %13 {offsets = [0, 0, 2, 0], sizes = [2, 16, 16, 32], strides = [1, 1, 1, 1]} : vector<2x18x18x32xf32> to vector<2x16x16x32xf32>
    %17 = vector.extract_strided_slice %13 {offsets = [0, 1, 0, 0], sizes = [2, 16, 16, 32], strides = [1, 1, 1, 1]} : vector<2x18x18x32xf32> to vector<2x16x16x32xf32>
    %18 = vector.extract_strided_slice %13 {offsets = [0, 1, 1, 0], sizes = [2, 16, 16, 32], strides = [1, 1, 1, 1]} : vector<2x18x18x32xf32> to vector<2x16x16x32xf32>
    %19 = vector.extract_strided_slice %13 {offsets = [0, 1, 2, 0], sizes = [2, 16, 16, 32], strides = [1, 1, 1, 1]} : vector<2x18x18x32xf32> to vector<2x16x16x32xf32>
    %20 = vector.extract_strided_slice %13 {offsets = [0, 2, 0, 0], sizes = [2, 16, 16, 32], strides = [1, 1, 1, 1]} : vector<2x18x18x32xf32> to vector<2x16x16x32xf32>
    %21 = vector.extract_strided_slice %13 {offsets = [0, 2, 1, 0], sizes = [2, 16, 16, 32], strides = [1, 1, 1, 1]} : vector<2x18x18x32xf32> to vector<2x16x16x32xf32>
    %22 = vector.extract_strided_slice %13 {offsets = [0, 2, 2, 0], sizes = [2, 16, 16, 32], strides = [1, 1, 1, 1]} : vector<2x18x18x32xf32> to vector<2x16x16x32xf32>
    %23 = tpu.concatenate %14, %15, %16, %17, %18, %19, %20, %21, %22 in 3 : vector<2x16x16x32xf32>, vector<2x16x16x32xf32>, vector<2x16x16x32xf32>, vector<2x16x16x32xf32>, vector<2x16x16x32xf32>, vector<2x16x16x32xf32>, vector<2x16x16x32xf32>, vector<2x16x16x32xf32>, vector<2x16x16x32xf32> -> vector<2x16x16x288xf32>
    %24 = vector.shape_cast %23 : vector<2x16x16x288xf32> to vector<512x288xf32>
    %c0_9 = arith.constant 0 : index
    %c0_10 = arith.constant 0 : index
    %25 = vector.load %arg4[%c0_9, %c0_10] : memref<288x32xf32, #tpu.memory_space<vmem>>, vector<288x32xf32>
    %cst_11 = arith.constant dense<0.000000e+00> : vector<512x32xf32>
    %26 = tpu.matmul %24, %25, %cst_11 {dimension_numbers = #tpu.dot_dimension_numbers<[1], [0], [0], [1], [0, 0, 1, 1], [], []>} : vector<512x288xf32>, vector<288x32xf32>, vector<512x32xf32> -> vector<512x32xf32>
    %c0_12 = arith.constant 0 : index
    %c0_13 = arith.constant 0 : index
    %27 = vector.load %arg5[%c0_12, %c0_13] : memref<1x32xf32, #tpu.memory_space<vmem>>, vector<1x32xf32>
    %28 = vector.broadcast %27 : vector<1x32xf32> to vector<512x32xf32>
    %29 = arith.addf %26, %28 : vector<512x32xf32>
    %cst_14 = arith.constant 0.000000e+00 : f32
    %30 = vector.broadcast %cst_14 : f32 to vector<512x32xf32>
    %31 = arith.maximumf %29, %30 : vector<512x32xf32>
    %32 = vector.shape_cast %31 : vector<512x32xf32> to vector<2x256x32xf32>
    %33 = tpu.transpose %32, [0, 2, 1] : vector<2x256x32xf32> -> vector<2x32x256xf32>
    %c0_15 = arith.constant 0 : index
    %c0_16 = arith.constant 0 : index
    %c0_17 = arith.constant 0 : index
    %34 = vector.load %arg6[%c0_15, %c0_16, %c0_17] : memref<2x32x256xf32, #tpu.memory_space<vmem>>, vector<2x32x256xf32>
    tpu.vector_store %arg6[%c0_15, %c0_16, %c0_17], %33 {strides = array<i32>} : memref<2x32x256xf32, #tpu.memory_space<vmem>>, vector<2x32x256xf32>,
    return
  }
  func.func @transform_0(%arg0: i32) -> (i32, i32, i32) {
    %c0_i32 = arith.constant 0 : i32
    %c0_i32_0 = arith.constant 0 : i32
    %c0_i32_1 = arith.constant 0 : i32
    return %arg0, %c0_i32, %c0_i32_0 : i32, i32, i32
  }
  func.func @transform_1(%arg0: i32) -> (i32, i32) {
    %c0_i32 = arith.constant 0 : i32
    %c0_i32_0 = arith.constant 0 : i32
    %c0_i32_1 = arith.constant 0 : i32
    return %c0_i32, %c0_i32_0 : i32, i32
  }
  func.func @transform_2(%arg0: i32) -> (i32, i32) {
    %c0_i32 = arith.constant 0 : i32
    %c0_i32_0 = arith.constant 0 : i32
    %c0_i32_1 = arith.constant 0 : i32
    return %c0_i32, %c0_i32_0 : i32, i32
  }
  func.func @transform_3(%arg0: i32) -> (i32, i32) {
    %c0_i32 = arith.constant 0 : i32
    %c0_i32_0 = arith.constant 0 : i32
    %c0_i32_1 = arith.constant 0 : i32
    return %c0_i32, %c0_i32_0 : i32, i32
  }
  func.func @transform_4(%arg0: i32) -> (i32, i32) {
    %c0_i32 = arith.constant 0 : i32
    %c0_i32_0 = arith.constant 0 : i32
    %c0_i32_1 = arith.constant 0 : i32
    return %c0_i32, %c0_i32_0 : i32, i32
  }
  func.func @transform_5(%arg0: i32) -> (i32, i32, i32) {
    %c0_i32 = arith.constant 0 : i32
    %c0_i32_0 = arith.constant 0 : i32
    %c0_i32_1 = arith.constant 0 : i32
    return %arg0, %c0_i32, %c0_i32_0 : i32, i32, i32
  }
}

</mosaic_0001>

<llo_original>
// kernel: protonet_forward.1
$region0: #{protonet_forward.1}
  #allocation0 [shape = 'u32[]', space=smem, size = 0x4, offset = 0x4, fixed_abs, tag = 'smem constant byte address 0x4 - core index']
  #allocation1 [shape = 'u32[72,128]{1,0:T(1,128)}', space=vmem, size = 0x9000, scoped, tag = 'internal scratch']
  %s0 = inlined_call_operand.vmem [shape: f32[2,256,36], index: 0, kind: input, shape index: {}]
  %s1 = inlined_call_operand.vmem [shape: f32[36,32], index: 1, kind: input, shape index: {}]
  %s2 = inlined_call_operand.vmem [shape: f32[1,32], index: 2, kind: input, shape index: {}]
  %s3 = inlined_call_operand.vmem [shape: f32[288,32], index: 3, kind: input, shape index: {}]
  %s4 = inlined_call_operand.vmem [shape: f32[1,32], index: 4, kind: input, shape index: {}]
  %s5 = inlined_call_operand.vmem [shape: f32[2,32,256], index: 5, kind: output, shape index: {}]
  %s6 = sld [smem:[#allocation0]]
  $region30: #{protonet_forward.1} parent=0
    _
  %s8 = ssub.s32 1, %s6
  %s9 = scalar_select 0, %s8, %s6
  // Predicated region
  $region2: #{protonet_forward.1} parent=0 // pred_check
    _
  $region3: #{protonet_forward.1} parent=0 // pred_check_branch
    %11 = sbr.rel (0) target = $region5
  $region4: #{protonet_forward.1} parent=0 // pred_region
    _
  $region5: #{protonet_forward.1} parent=0 // pred_fallthru
    _
  // Predicated region
  $region6: #{protonet_forward.1} parent=0 // pred_check
    _
  $region7: #{protonet_forward.1} parent=0 // pred_check_branch
    %13 = sbr.rel (0) target = $region9
  $region8: #{protonet_forward.1} parent=0 // pred_region
    _
  $region9: #{protonet_forward.1} parent=0 // pred_fallthru
    _
  // Predicated region
  $region10: #{protonet_forward.1} parent=0 // pred_check
    _
  $region11: #{protonet_forward.1} parent=0 // pred_check_branch
    %15 = sbr.rel (0) target = $region13
  $region12: #{protonet_forward.1} parent=0 // pred_region
    _
  $region13: #{protonet_forward.1} parent=0 // pred_fallthru
    _
  // Predicated region
  $region14: #{protonet_forward.1} parent=0 // pred_check
    _
  $region15: #{protonet_forward.1} parent=0 // pred_check_branch
    %17 = sbr.rel (0) target = $region17
  $region16: #{protonet_forward.1} parent=0 // pred_region
    _
  $region17: #{protonet_forward.1} parent=0 // pred_fallthru
    _
  // Predicated region
  $region18: #{protonet_forward.1} parent=0 // pred_check
    _
  $region19: #{protonet_forward.1} parent=0 // pred_check_branch
    %19 = sbr.rel (0) target = $region21
  $region20: #{protonet_forward.1} parent=0 // pred_region
    _
  $region21: #{protonet_forward.1} parent=0 // pred_fallthru
    _
  %v20 = vld [vmem:[%s0] sm:$0xff]
  %v21 = vld [vmem:[%s0 + $0x8] sm:$0xff]
  %v22 = vld [vmem:[%s0 + $0x10] sm:$0xff]
  %v23 = vld [vmem:[%s0 + $0x18] sm:$0xff]
  %v24 = vld [vmem:[%s0 + $0x20] sm:$0xff]
  %v25 = vld [vmem:[%s0 + $0x28] sm:$0xff]
  %v26 = vld [vmem:[%s0 + $0x30] sm:$0xff]
  %v27 = vld [vmem:[%s0 + $0x38] sm:$0xff]
  %v28 = vld [vmem:[%s0 + $0x40] sm:$0xff]
  %v29 = vld [vmem:[%s0 + $0x48] sm:$0xff]
  %v30 = vld [vmem:[%s0 + $0x50] sm:$0xff]
  %v31 = vld [vmem:[%s0 + $0x58] sm:$0xff]
  %v32 = vld [vmem:[%s0 + $0x60] sm:$0xff]
  %v33 = vld [vmem:[%s0 + $0x68] sm:$0xff]
  %v34 = vld [vmem:[%s0 + $0x70] sm:$0xff]
  %v35 = vld [vmem:[%s0 + $0x78] sm:$0xff]
  %v36 = vld [vmem:[%s0 + $0x80] sm:$0xff]
  %v37 = vld [vmem:[%s0 + $0x88] sm:$0xff]
  %v38 = vld [vmem:[%s0 + $0x90] sm:$0xff]
  %v39 = vld [vmem:[%s0 + $0x98] sm:$0xff]
  %v40 = vld [vmem:[%s0 + $0xa0] sm:$0xff]
  %v41 = vld [vmem:[%s0 + $0xa8] sm:$0xff]
  %v42 = vld [vmem:[%s0 + $0xb0] sm:$0xff]
  %v43 = vld [vmem:[%s0 + $0xb8] sm:$0xff]
  %v44 = vld [vmem:[%s0 + $0xc0] sm:$0xff]
  %v45 = vld [vmem:[%s0 + $0xc8] sm:$0xff]
  %v46 = vld [vmem:[%s0 + $0xd0] sm:$0xff]
  %v47 = vld [vmem:[%s0 + $0xd8] sm:$0xff]
  %v48 = vld [vmem:[%s0 + $0xe0] sm:$0xff]
  %v49 = vld [vmem:[%s0 + $0xe8] sm:$0xff]
  %v50 = vld [vmem:[%s0 + $0xf0] sm:$0xff]
  %v51 = vld [vmem:[%s0 + $0xf8] sm:$0xff]
  %v52 = vld [vmem:[%s0 + $0x100] sm:$0xff]
  %v53 = vld [vmem:[%s0 + $0x108] sm:$0xff]
  %v54 = vld [vmem:[%s0 + $0x110] sm:$0xff]
  %v55 = vld [vmem:[%s0 + $0x118] sm:$0xff]
  %v56 = vld [vmem:[%s0 + $0x120] sm:$0xff]
  %v57 = vld [vmem:[%s0 + $0x128] sm:$0xff]
  %v58 = vld [vmem:[%s0 + $0x130] sm:$0xff]
  %v59 = vld [vmem:[%s0 + $0x138] sm:$0xff]
  %v60 = vld [vmem:[%s0 + $0x140] sm:$0xff]
  %v61 = vld [vmem:[%s0 + $0x148] sm:$0xff]
  %v62 = vld [vmem:[%s0 + $0x150] sm:$0xff]
  %v63 = vld [vmem:[%s0 + $0x158] sm:$0xff]
  %v64 = vld [vmem:[%s0 + $0x160] sm:$0xff]
  %v65 = vld [vmem:[%s0 + $0x168] sm:$0xff]
  %v66 = vld [vmem:[%s0 + $0x170] sm:$0xff]
  %v67 = vld [vmem:[%s0 + $0x178] sm:$0xff]
  %v68 = vld [vmem:[%s0 + $0x180] sm:$0xff]
  %v69 = vld [vmem:[%s0 + $0x188] sm:$0xff]
  %v70 = vld [vmem:[%s0 + $0x190] sm:$0xff]
  %v71 = vld [vmem:[%s0 + $0x198] sm:$0xff]
  %v72 = vld [vmem:[%s0 + $0x1a0] sm:$0xff]
  %v73 = vld [vmem:[%s0 + $0x1a8] sm:$0xff]
  %v74 = vld [vmem:[%s0 + $0x1b0] sm:$0xff]
  %v75 = vld [vmem:[%s0 + $0x1b8] sm:$0xff]
  %v76 = vld [vmem:[%s0 + $0x1c0] sm:$0xff]
  %v77 = vld [vmem:[%s0 + $0x1c8] sm:$0xff]
  %v78 = vld [vmem:[%s0 + $0x1d0] sm:$0xff]
  %v79 = vld [vmem:[%s0 + $0x1d8] sm:$0xff]
  %v80 = vld [vmem:[%s0 + $0x1e0] sm:$0xff]
  %v81 = vld [vmem:[%s0 + $0x1e8] sm:$0xff]
  %v82 = vld [vmem:[%s0 + $0x1f0] sm:$0xff]
  %v83 = vld [vmem:[%s0 + $0x1f8] sm:$0xff]
  %v84 = vld [vmem:[%s1] sm:$0xff]
  %v85 = vld [vmem:[%s1 + $0x8] sm:$0xff]
  %v86 = vld [vmem:[%s1 + $0x10] sm:$0xff]
  %v87 = vld [vmem:[%s1 + $0x18] sm:$0xff]
  %v88 = vld [vmem:[%s1 + $0x20] sm:$0xf]
  %v89 = vld [vmem:[%s2] sm:$0x1]
  %v91 = vperm.slane %v89, 0
  %vm93 = vcmask 293888
  %v95 = vsel %vm93, %v20, 0
  %v98 = vsel %vm93, %v21, 0
  %v101 = vsel %vm93, %v22, 0
  %v104 = vsel %vm93, %v23, 0
  %v107 = vsel %vm93, %v24, 0
  %v110 = vsel %vm93, %v25, 0
  %v113 = vsel %vm93, %v26, 0
  %v116 = vsel %vm93, %v27, 0
  %v119 = vsel %vm93, %v28, 0
  %v122 = vsel %vm93, %v29, 0
  %v125 = vsel %vm93, %v30, 0
  %v128 = vsel %vm93, %v31, 0
  %v131 = vsel %vm93, %v32, 0
  %v134 = vsel %vm93, %v33, 0
  %v137 = vsel %vm93, %v34, 0
  %v140 = vsel %vm93, %v35, 0
  %v143 = vsel %vm93, %v36, 0
  %v146 = vsel %vm93, %v37, 0
  %v149 = vsel %vm93, %v38, 0
  %v152 = vsel %vm93, %v39, 0
  %v155 = vsel %vm93, %v40, 0
  %v158 = vsel %vm93, %v41, 0
  %v161 = vsel %vm93, %v42, 0
  %v164 = vsel %vm93, %v43, 0
  %v167 = vsel %vm93, %v44, 0
  %v170 = vsel %vm93, %v45, 0
  %v173 = vsel %vm93, %v46, 0
  %v176 = vsel %vm93, %v47, 0
  %v179 = vsel %vm93, %v48, 0
  %v182 = vsel %vm93, %v49, 0
  %v185 = vsel %vm93, %v50, 0
  %v188 = vsel %vm93, %v51, 0
  %v191 = vsel %vm93, %v52, 0
  %v194 = vsel %vm93, %v53, 0
  %v197 = vsel %vm93, %v54, 0
  %v200 = vsel %vm93, %v55, 0
  %v203 = vsel %vm93, %v56, 0
  %v206 = vsel %vm93, %v57, 0
  %v209 = vsel %vm93, %v58, 0
  %v212 = vsel %vm93, %v59, 0
  %v215 = vsel %vm93, %v60, 0
  %v218 = vsel %vm93, %v61, 0
  %v221 = vsel %vm93, %v62, 0
  %v224 = vsel %vm93, %v63, 0
  %v227 = vsel %vm93, %v64, 0
  %v230 = vsel %vm93, %v65, 0
  %v233 = vsel %vm93, %v66, 0
  %v236 = vsel %vm93, %v67, 0
  %v239 = vsel %vm93, %v68, 0
  %v242 = vsel %vm93, %v69, 0
  %v245 = vsel %vm93, %v70, 0
  %v248 = vsel %vm93, %v71, 0
  %v251 = vsel %vm93, %v72, 0
  %v254 = vsel %vm93, %v73, 0
  %v257 = vsel %vm93, %v74, 0
  %v260 = vsel %vm93, %v75, 0
  %v263 = vsel %vm93, %v76, 0
  %v266 = vsel %vm93, %v77, 0
  %v269 = vsel %vm93, %v78, 0
  %v272 = vsel %vm93, %v79, 0
  %v275 = vsel %vm93, %v80, 0
  %v278 = vsel %vm93, %v81, 0
  %v281 = vsel %vm93, %v82, 0
  %v284 = vsel %vm93, %v83, 0
  %vm286 = vcmask 1043456
  %v288 = vsel %vm286, %v88, 0
  %290 = vmatpush.msra.mxu0 0.0
  %291 = vmatpush.msra.mxu0 0.0
  %292 = vmatpush.msra.mxu0 0.0
  %293 = vmatpush.msra.mxu0 0.0
  %294 = vmatpush.msra.mxu0 0.0
  %295 = vmatpush.msra.mxu0 0.0
  %296 = vmatpush.msra.mxu0 0.0
  %297 = vmatpush.msra.mxu0 0.0
  %298 = vmatpush.msra.mxu0 0.0
  %299 = vmatpush.msra.mxu0 0.0
  %300 = vmatpush.msra.mxu0 0.0
  %301 = vmatpush.msra.mxu0 %v288
  %302 = vmatpush.msra.mxu0 %v87
  %303 = vmatpush.msra.mxu0 %v86
  %304 = vmatpush.msra.mxu0 %v85
  %305 = vmatpush.msra.mxu0 %v84
  %306 = vmatmul.f32.gmra.mxu0 %v95
  %v307 = vpop.f32.mrf.mxu0
  %v308 = vadd.f32 %v91, %v307
  %309 = vmatmul.f32.gmra.mxu0 %v98
  %v310 = vpop.f32.mrf.mxu0
  %v311 = vadd.f32 %v91, %v310
  %312 = vmatmul.f32.gmra.mxu0 %v101
  %v313 = vpop.f32.mrf.mxu0
  %v314 = vadd.f32 %v91, %v313
  %315 = vmatmul.f32.gmra.mxu0 %v104
  %v316 = vpop.f32.mrf.mxu0
  %v317 = vadd.f32 %v91, %v316
  %318 = vmatmul.f32.gmra.mxu0 %v107
  %v319 = vpop.f32.mrf.mxu0
  %v320 = vadd.f32 %v91, %v319
  %321 = vmatmul.f32.gmra.mxu0 %v110
  %v322 = vpop.f32.mrf.mxu0
  %v323 = vadd.f32 %v91, %v322
  %324 = vmatmul.f32.gmra.mxu0 %v113
  %v325 = vpop.f32.mrf.mxu0
  %v326 = vadd.f32 %v91, %v325
  %327 = vmatmul.f32.gmra.mxu0 %v116
  %v328 = vpop.f32.mrf.mxu0
  %v329 = vadd.f32 %v91, %v328
  %330 = vmatmul.f32.gmra.mxu0 %v119
  %v331 = vpop.f32.mrf.mxu0
  %v332 = vadd.f32 %v91, %v331
  %333 = vmatmul.f32.gmra.mxu0 %v122
  %v334 = vpop.f32.mrf.mxu0
  %v335 = vadd.f32 %v91, %v334
  %336 = vmatmul.f32.gmra.mxu0 %v125
  %v337 = vpop.f32.mrf.mxu0
  %v338 = vadd.f32 %v91, %v337
  %339 = vmatmul.f32.gmra.mxu0 %v128
  %v340 = vpop.f32.mrf.mxu0
  %v341 = vadd.f32 %v91, %v340
  %342 = vmatmul.f32.gmra.mxu0 %v131
  %v343 = vpop.f32.mrf.mxu0
  %v344 = vadd.f32 %v91, %v343
  %345 = vmatmul.f32.gmra.mxu0 %v134
  %v346 = vpop.f32.mrf.mxu0
  %v347 = vadd.f32 %v91, %v346
  %348 = vmatmul.f32.gmra.mxu0 %v137
  %v349 = vpop.f32.mrf.mxu0
  %v350 = vadd.f32 %v91, %v349
  %351 = vmatmul.f32.gmra.mxu0 %v140
  %v352 = vpop.f32.mrf.mxu0
  %v353 = vadd.f32 %v91, %v352
  %354 = vmatmul.f32.gmra.mxu0 %v143
  %v355 = vpop.f32.mrf.mxu0
  %v356 = vadd.f32 %v91, %v355
  %357 = vmatmul.f32.gmra.mxu0 %v146
  %v358 = vpop.f32.mrf.mxu0
  %v359 = vadd.f32 %v91, %v358
  %360 = vmatmul.f32.gmra.mxu0 %v149
  %v361 = vpop.f32.mrf.mxu0
  %v362 = vadd.f32 %v91, %v361
  %363 = vmatmul.f32.gmra.mxu0 %v152
  %v364 = vpop.f32.mrf.mxu0
  %v365 = vadd.f32 %v91, %v364
  %366 = vmatmul.f32.gmra.mxu0 %v155
  %v367 = vpop.f32.mrf.mxu0
  %v368 = vadd.f32 %v91, %v367
  %369 = vmatmul.f32.gmra.mxu0 %v158
  %v370 = vpop.f32.mrf.mxu0
  %v371 = vadd.f32 %v91, %v370
  %372 = vmatmul.f32.gmra.mxu0 %v161
  %v373 = vpop.f32.mrf.mxu0
  %v374 = vadd.f32 %v91, %v373
  %375 = vmatmul.f32.gmra.mxu0 %v164
  %v376 = vpop.f32.mrf.mxu0
  %v377 = vadd.f32 %v91, %v376
  %378 = vmatmul.f32.gmra.mxu0 %v167
  %v379 = vpop.f32.mrf.mxu0
  %v380 = vadd.f32 %v91, %v379
  %381 = vmatmul.f32.gmra.mxu0 %v170
  %v382 = vpop.f32.mrf.mxu0
  %v383 = vadd.f32 %v91, %v382
  %384 = vmatmul.f32.gmra.mxu0 %v173
  %v385 = vpop.f32.mrf.mxu0
  %v386 = vadd.f32 %v91, %v385
  %387 = vmatmul.f32.gmra.mxu0 %v176
  %v388 = vpop.f32.mrf.mxu0
  %v389 = vadd.f32 %v91, %v388
  %390 = vmatmul.f32.gmra.mxu0 %v179
  %v391 = vpop.f32.mrf.mxu0
  %v392 = vadd.f32 %v91, %v391
  %393 = vmatmul.f32.gmra.mxu0 %v182
  %v394 = vpop.f32.mrf.mxu0
  %v395 = vadd.f32 %v91, %v394
  %396 = vmatmul.f32.gmra.mxu0 %v185
  %v397 = vpop.f32.mrf.mxu0
  %v398 = vadd.f32 %v91, %v397
  %399 = vmatmul.f32.gmra.mxu0 %v188
  %v400 = vpop.f32.mrf.mxu0
  %v401 = vadd.f32 %v91, %v400
  %402 = vmatmul.f32.gmra.mxu0 %v191
  %v403 = vpop.f32.mrf.mxu0
  %v404 = vadd.f32 %v91, %v403
  %405 = vmatmul.f32.gmra.mxu0 %v194
  %v406 = vpop.f32.mrf.mxu0
  %v407 = vadd.f32 %v91, %v406
  %408 = vmatmul.f32.gmra.mxu0 %v197
  %v409 = vpop.f32.mrf.mxu0
  %v410 = vadd.f32 %v91, %v409
  %411 = vmatmul.f32.gmra.mxu0 %v200
  %v412 = vpop.f32.mrf.mxu0
  %v413 = vadd.f32 %v91, %v412
  %414 = vmatmul.f32.gmra.mxu0 %v203
  %v415 = vpop.f32.mrf.mxu0
  %v416 = vadd.f32 %v91, %v415
  %417 = vmatmul.f32.gmra.mxu0 %v206
  %v418 = vpop.f32.mrf.mxu0
  %v419 = vadd.f32 %v91, %v418
  %420 = vmatmul.f32.gmra.mxu0 %v209
  %v421 = vpop.f32.mrf.mxu0
  %v422 = vadd.f32 %v91, %v421
  %423 = vmatmul.f32.gmra.mxu0 %v212
  %v424 = vpop.f32.mrf.mxu0
  %v425 = vadd.f32 %v91, %v424
  %426 = vmatmul.f32.gmra.mxu0 %v215
  %v427 = vpop.f32.mrf.mxu0
  %v428 = vadd.f32 %v91, %v427
  %429 = vmatmul.f32.gmra.mxu0 %v218
  %v430 = vpop.f32.mrf.mxu0
  %v431 = vadd.f32 %v91, %v430
  %432 = vmatmul.f32.gmra.mxu0 %v221
  %v433 = vpop.f32.mrf.mxu0
  %v434 = vadd.f32 %v91, %v433
  %435 = vmatmul.f32.gmra.mxu0 %v224
  %v436 = vpop.f32.mrf.mxu0
  %v437 = vadd.f32 %v91, %v436
  %438 = vmatmul.f32.gmra.mxu0 %v227
  %v439 = vpop.f32.mrf.mxu0
  %v440 = vadd.f32 %v91, %v439
  %441 = vmatmul.f32.gmra.mxu0 %v230
  %v442 = vpop.f32.mrf.mxu0
  %v443 = vadd.f32 %v91, %v442
  %444 = vmatmul.f32.gmra.mxu0 %v233
  %v445 = vpop.f32.mrf.mxu0
  %v446 = vadd.f32 %v91, %v445
  %447 = vmatmul.f32.gmra.mxu0 %v236
  %v448 = vpop.f32.mrf.mxu0
  %v449 = vadd.f32 %v91, %v448
  %450 = vmatmul.f32.gmra.mxu0 %v239
  %v451 = vpop.f32.mrf.mxu0
  %v452 = vadd.f32 %v91, %v451
  %453 = vmatmul.f32.gmra.mxu0 %v242
  %v454 = vpop.f32.mrf.mxu0
  %v455 = vadd.f32 %v91, %v454
  %456 = vmatmul.f32.gmra.mxu0 %v245
  %v457 = vpop.f32.mrf.mxu0
  %v458 = vadd.f32 %v91, %v457
  %459 = vmatmul.f32.gmra.mxu0 %v248
  %v460 = vpop.f32.mrf.mxu0
  %v461 = vadd.f32 %v91, %v460
  %462 = vmatmul.f32.gmra.mxu0 %v251
  %v463 = vpop.f32.mrf.mxu0
  %v464 = vadd.f32 %v91, %v463
  %465 = vmatmul.f32.gmra.mxu0 %v254
  %v466 = vpop.f32.mrf.mxu0
  %v467 = vadd.f32 %v91, %v466
  %468 = vmatmul.f32.gmra.mxu0 %v257
  %v469 = vpop.f32.mrf.mxu0
  %v470 = vadd.f32 %v91, %v469
  %471 = vmatmul.f32.gmra.mxu0 %v260
  %v472 = vpop.f32.mrf.mxu0
  %v473 = vadd.f32 %v91, %v472
  %474 = vmatmul.f32.gmra.mxu0 %v263
  %v475 = vpop.f32.mrf.mxu0
  %v476 = vadd.f32 %v91, %v475
  %477 = vmatmul.f32.gmra.mxu0 %v266
  %v478 = vpop.f32.mrf.mxu0
  %v479 = vadd.f32 %v91, %v478
  %480 = vmatmul.f32.gmra.mxu0 %v269
  %v481 = vpop.f32.mrf.mxu0
  %v482 = vadd.f32 %v91, %v481
  %483 = vmatmul.f32.gmra.mxu0 %v272
  %v484 = vpop.f32.mrf.mxu0
  %v485 = vadd.f32 %v91, %v484
  %486 = vmatmul.f32.gmra.mxu0 %v275
  %v487 = vpop.f32.mrf.mxu0
  %v488 = vadd.f32 %v91, %v487
  %489 = vmatmul.f32.gmra.mxu0 %v278
  %v490 = vpop.f32.mrf.mxu0
  %v491 = vadd.f32 %v91, %v490
  %492 = vmatmul.f32.gmra.mxu0 %v281
  %v493 = vpop.f32.mrf.mxu0
  %v494 = vadd.f32 %v91, %v493
  %495 = vmatmul.f32.gmra.mxu0 %v284
  %v496 = vpop.f32.mrf.mxu0
  %v497 = vadd.f32 %v91, %v496
  %498 = vdwg.mxu0
  %v499 = vmax.f32 %v308, 0.0
  %v500 = vmax.f32 %v311, 0.0
  %v501 = vmax.f32 %v314, 0.0
  %v502 = vmax.f32 %v317, 0.0
  %v503 = vmax.f32 %v320, 0.0
  %v504 = vmax.f32 %v323, 0.0
  %v505 = vmax.f32 %v326, 0.0
  %v506 = vmax.f32 %v329, 0.0
  %v507 = vmax.f32 %v332, 0.0
  %v508 = vmax.f32 %v335, 0.0
  %v509 = vmax.f32 %v338, 0.0
  %v510 = vmax.f32 %v341, 0.0
  %v511 = vmax.f32 %v344, 0.0
  %v512 = vmax.f32 %v347, 0.0
  %v513 = vmax.f32 %v350, 0.0
  %v514 = vmax.f32 %v353, 0.0
  %v515 = vmax.f32 %v356, 0.0
  %v516 = vmax.f32 %v359, 0.0
  %v517 = vmax.f32 %v362, 0.0
  %v518 = vmax.f32 %v365, 0.0
  %v519 = vmax.f32 %v368, 0.0
  %v520 = vmax.f32 %v371, 0.0
  %v521 = vmax.f32 %v374, 0.0
  %v522 = vmax.f32 %v377, 0.0
  %v523 = vmax.f32 %v380, 0.0
  %v524 = vmax.f32 %v383, 0.0
  %v525 = vmax.f32 %v386, 0.0
  %v526 = vmax.f32 %v389, 0.0
  %v527 = vmax.f32 %v392, 0.0
  %v528 = vmax.f32 %v395, 0.0
  %v529 = vmax.f32 %v398, 0.0
  %v530 = vmax.f32 %v401, 0.0
  %v531 = vmax.f32 %v404, 0.0
  %v532 = vmax.f32 %v407, 0.0
  %v533 = vmax.f32 %v410, 0.0
  %v534 = vmax.f32 %v413, 0.0
  %v535 = vmax.f32 %v416, 0.0
  %v536 = vmax.f32 %v419, 0.0
  %v537 = vmax.f32 %v422, 0.0
  %v538 = vmax.f32 %v425, 0.0
  %v539 = vmax.f32 %v428, 0.0
  %v540 = vmax.f32 %v431, 0.0
  %v541 = vmax.f32 %v434, 0.0
  %v542 = vmax.f32 %v437, 0.0
  %v543 = vmax.f32 %v440, 0.0
  %v544 = vmax.f32 %v443, 0.0
  %v545 = vmax.f32 %v446, 0.0
  %v546 = vmax.f32 %v449, 0.0
  %v547 = vmax.f32 %v452, 0.0
  %v548 = vmax.f32 %v455, 0.0
  %v549 = vmax.f32 %v458, 0.0
  %v550 = vmax.f32 %v461, 0.0
  %v551 = vmax.f32 %v464, 0.0
  %v552 = vmax.f32 %v467, 0.0
  %v553 = vmax.f32 %v470, 0.0
  %v554 = vmax.f32 %v473, 0.0
  %v555 = vmax.f32 %v476, 0.0
  %v556 = vmax.f32 %v479, 0.0
  %v557 = vmax.f32 %v482, 0.0
  %v558 = vmax.f32 %v485, 0.0
  %v559 = vmax.f32 %v488, 0.0
  %v560 = vmax.f32 %v491, 0.0
  %v561 = vmax.f32 %v494, 0.0
  %v562 = vmax.f32 %v497, 0.0
  %vm628 = vcmask 1040384
  %v629 = vrot.slane 0.0, 7
  %v630 = vsel %vm628, %v629, %v629
  %v631 = vrot.slane %v499, 7
  %v632 = vrot.slane %v500, 7
  %v633 = vsel %vm628, %v631, %v632
  %v634 = vrot.slane %v501, 7
  %v635 = vrot.slane %v502, 7
  %v636 = vsel %vm628, %v634, %v635
  %v637 = vrot.slane %v503, 7
  %v638 = vrot.slane %v504, 7
  %v639 = vsel %vm628, %v637, %v638
  %v640 = vrot.slane %v505, 7
  %v641 = vrot.slane %v506, 7
  %v642 = vsel %vm628, %v640, %v641
  %v643 = vrot.slane %v507, 7
  %v644 = vrot.slane %v508, 7
  %v645 = vsel %vm628, %v643, %v644
  %v646 = vrot.slane %v509, 7
  %v647 = vrot.slane %v510, 7
  %v648 = vsel %vm628, %v646, %v647
  %v649 = vrot.slane %v511, 7
  %v650 = vrot.slane %v512, 7
  %v651 = vsel %vm628, %v649, %v650
  %v652 = vrot.slane %v513, 7
  %v653 = vrot.slane %v514, 7
  %v654 = vsel %vm628, %v652, %v653
  %v655 = vrot.slane %v515, 7
  %v656 = vrot.slane %v516, 7
  %v657 = vsel %vm628, %v655, %v656
  %v658 = vrot.slane %v517, 7
  %v659 = vrot.slane %v518, 7
  %v660 = vsel %vm628, %v658, %v659
  %v661 = vrot.slane %v519, 7
  %v662 = vrot.slane %v520, 7
  %v663 = vsel %vm628, %v661, %v662
  %v664 = vrot.slane %v521, 7
  %v665 = vrot.slane %v522, 7
  %v666 = vsel %vm628, %v664, %v665
  %v667 = vrot.slane %v523, 7
  %v668 = vrot.slane %v524, 7
  %v669 = vsel %vm628, %v667, %v668
  %v670 = vrot.slane %v525, 7
  %v671 = vrot.slane %v526, 7
  %v672 = vsel %vm628, %v670, %v671
  %v673 = vrot.slane %v527, 7
  %v674 = vrot.slane %v528, 7
  %v675 = vsel %vm628, %v673, %v674
  %v676 = vrot.slane %v529, 7
  %v677 = vrot.slane %v530, 7
  %v678 = vsel %vm628, %v676, %v677
  %v679 = vrot.slane %v531, 7
  %v680 = vrot.slane %v532, 7
  %v681 = vsel %vm628, %v679, %v680
  %v682 = vrot.slane %v533, 7
  %v683 = vrot.slane %v534, 7
  %v684 = vsel %vm628, %v682, %v683
  %v685 = vrot.slane %v535, 7
  %v686 = vrot.slane %v536, 7
  %v687 = vsel %vm628, %v685, %v686
  %v688 = vrot.slane %v537, 7
  %v689 = vrot.slane %v538, 7
  %v690 = vsel %vm628, %v688, %v689
  %v691 = vrot.slane %v539, 7
  %v692 = vrot.slane %v540, 7
  %v693 = vsel %vm628, %v691, %v692
  %v694 = vrot.slane %v541, 7
  %v695 = vrot.slane %v542, 7
  %v696 = vsel %vm628, %v694, %v695
  %v697 = vrot.slane %v543, 7
  %v698 = vrot.slane %v544, 7
  %v699 = vsel %vm628, %v697, %v698
  %v700 = vrot.slane %v545, 7
  %v701 = vrot.slane %v546, 7
  %v702 = vsel %vm628, %v700, %v701
  %v703 = vrot.slane %v547, 7
  %v704 = vrot.slane %v548, 7
  %v705 = vsel %vm628, %v703, %v704
  %v706 = vrot.slane %v549, 7
  %v707 = vrot.slane %v550, 7
  %v708 = vsel %vm628, %v706, %v707
  %v709 = vrot.slane %v551, 7
  %v710 = vrot.slane %v552, 7
  %v711 = vsel %vm628, %v709, %v710
  %v712 = vrot.slane %v553, 7
  %v713 = vrot.slane %v554, 7
  %v714 = vsel %vm628, %v712, %v713
  %v715 = vrot.slane %v555, 7
  %v716 = vrot.slane %v556, 7
  %v717 = vsel %vm628, %v715, %v716
  %v718 = vrot.slane %v557, 7
  %v719 = vrot.slane %v558, 7
  %v720 = vsel %vm628, %v718, %v719
  %v721 = vrot.slane %v559, 7
  %v722 = vrot.slane %v560, 7
  %v723 = vsel %vm628, %v721, %v722
  %v724 = vrot.slane %v561, 7
  %v725 = vrot.slane %v562, 7
  %v726 = vsel %vm628, %v724, %v725
  %v823 = vsel %vm628, 0.0, %v629
  %v824 = vsel %vm628, 0.0, %v631
  %v825 = vsel %vm628, 0.0, %v634
  %v826 = vsel %vm628, 0.0, %v637
  %v827 = vsel %vm628, 0.0, %v640
  %v828 = vsel %vm628, 0.0, %v643
  %v829 = vsel %vm628, 0.0, %v646
  %v830 = vsel %vm628, 0.0, %v649
  %v831 = vsel %vm628, 0.0, %v652
  %v832 = vsel %vm628, 0.0, %v655
  %v833 = vsel %vm628, 0.0, %v658
  %v834 = vsel %vm628, 0.0, %v661
  %v835 = vsel %vm628, 0.0, %v664
  %v836 = vsel %vm628, 0.0, %v667
  %v837 = vsel %vm628, 0.0, %v670
  %v838 = vsel %vm628, 0.0, %v673
  %v839 = vsel %vm628, 0.0, %v676
  %v840 = vsel %vm628, 0.0, %v679
  %v841 = vsel %vm628, 0.0, %v682
  %v842 = vsel %vm628, 0.0, %v685
  %v843 = vsel %vm628, 0.0, %v688
  %v844 = vsel %vm628, 0.0, %v691
  %v845 = vsel %vm628, 0.0, %v694
  %v846 = vsel %vm628, 0.0, %v697
  %v847 = vsel %vm628, 0.0, %v700
  %v848 = vsel %vm628, 0.0, %v703
  %v849 = vsel %vm628, 0.0, %v706
  %v850 = vsel %vm628, 0.0, %v709
  %v851 = vsel %vm628, 0.0, %v712
  %v852 = vsel %vm628, 0.0, %v715
  %v853 = vsel %vm628, 0.0, %v718
  %v854 = vsel %vm628, 0.0, %v721
  %v855 = vsel %vm628, 0.0, %v724
  %v856 = vsel %vm628, %v629, 0.0
  %v857 = vsel %vm628, %v632, 0.0
  %v858 = vsel %vm628, %v635, 0.0
  %v859 = vsel %vm628, %v638, 0.0
  %v860 = vsel %vm628, %v641, 0.0
  %v861 = vsel %vm628, %v644, 0.0
  %v862 = vsel %vm628, %v647, 0.0
  %v863 = vsel %vm628, %v650, 0.0
  %v864 = vsel %vm628, %v653, 0.0
  %v865 = vsel %vm628, %v656, 0.0
  %v866 = vsel %vm628, %v659, 0.0
  %v867 = vsel %vm628, %v662, 0.0
  %v868 = vsel %vm628, %v665, 0.0
  %v869 = vsel %vm628, %v668, 0.0
  %v870 = vsel %vm628, %v671, 0.0
  %v871 = vsel %vm628, %v674, 0.0
  %v872 = vsel %vm628, %v677, 0.0
  %v873 = vsel %vm628, %v680, 0.0
  %v874 = vsel %vm628, %v683, 0.0
  %v875 = vsel %vm628, %v686, 0.0
  %v876 = vsel %vm628, %v689, 0.0
  %v877 = vsel %vm628, %v692, 0.0
  %v878 = vsel %vm628, %v695, 0.0
  %v879 = vsel %vm628, %v698, 0.0
  %v880 = vsel %vm628, %v701, 0.0
  %v881 = vsel %vm628, %v704, 0.0
  %v882 = vsel %vm628, %v707, 0.0
  %v883 = vsel %vm628, %v710, 0.0
  %v884 = vsel %vm628, %v713, 0.0
  %v885 = vsel %vm628, %v716, 0.0
  %v886 = vsel %vm628, %v719, 0.0
  %v887 = vsel %vm628, %v722, 0.0
  %v888 = vsel %vm628, %v725, 0.0
  %vm951 = vcmask 1046528
  %v952 = vrot.slane %v823, 1
  %v953 = vrot.slane %v630, 1
  %v954 = vsel %vm951, %v952, %v953
  %v955 = vrot.slane %v856, 1
  %v956 = vsel %vm951, %v953, %v955
  %v957 = vrot.slane %v824, 1
  %v958 = vrot.slane %v633, 1
  %v959 = vsel %vm951, %v957, %v958
  %v960 = vrot.slane %v857, 1
  %v961 = vsel %vm951, %v958, %v960
  %v962 = vrot.slane %v825, 1
  %v963 = vrot.slane %v636, 1
  %v964 = vsel %vm951, %v962, %v963
  %v965 = vrot.slane %v858, 1
  %v966 = vsel %vm951, %v963, %v965
  %v967 = vrot.slane %v826, 1
  %v968 = vrot.slane %v639, 1
  %v969 = vsel %vm951, %v967, %v968
  %v970 = vrot.slane %v859, 1
  %v971 = vsel %vm951, %v968, %v970
  %v972 = vrot.slane %v827, 1
  %v973 = vrot.slane %v642, 1
  %v974 = vsel %vm951, %v972, %v973
  %v975 = vrot.slane %v860, 1
  %v976 = vsel %vm951, %v973, %v975
  %v977 = vrot.slane %v828, 1
  %v978 = vrot.slane %v645, 1
  %v979 = vsel %vm951, %v977, %v978
  %v980 = vrot.slane %v861, 1
  %v981 = vsel %vm951, %v978, %v980
  %v982 = vrot.slane %v829, 1
  %v983 = vrot.slane %v648, 1
  %v984 = vsel %vm951, %v982, %v983
  %v985 = vrot.slane %v862, 1
  %v986 = vsel %vm951, %v983, %v985
  %v987 = vrot.slane %v830, 1
  %v988 = vrot.slane %v651, 1
  %v989 = vsel %vm951, %v987, %v988
  %v990 = vrot.slane %v863, 1
  %v991 = vsel %vm951, %v988, %v990
  %v992 = vrot.slane %v831, 1
  %v993 = vrot.slane %v654, 1
  %v994 = vsel %vm951, %v992, %v993
  %v995 = vrot.slane %v864, 1
  %v996 = vsel %vm951, %v993, %v995
  %v997 = vrot.slane %v832, 1
  %v998 = vrot.slane %v657, 1
  %v999 = vsel %vm951, %v997, %v998
  %v1000 = vrot.slane %v865, 1
  %v1001 = vsel %vm951, %v998, %v1000
  %v1002 = vrot.slane %v833, 1
  %v1003 = vrot.slane %v660, 1
  %v1004 = vsel %vm951, %v1002, %v1003
  %v1005 = vrot.slane %v866, 1
  %v1006 = vsel %vm951, %v1003, %v1005
  %v1007 = vrot.slane %v834, 1
  %v1008 = vrot.slane %v663, 1
  %v1009 = vsel %vm951, %v1007, %v1008
  %v1010 = vrot.slane %v867, 1
  %v1011 = vsel %vm951, %v1008, %v1010
  %v1012 = vrot.slane %v835, 1
  %v1013 = vrot.slane %v666, 1
  %v1014 = vsel %vm951, %v1012, %v1013
  %v1015 = vrot.slane %v868, 1
  %v1016 = vsel %vm951, %v1013, %v1015
  %v1017 = vrot.slane %v836, 1
  %v1018 = vrot.slane %v669, 1
  %v1019 = vsel %vm951, %v1017, %v1018
  %v1020 = vrot.slane %v869, 1
  %v1021 = vsel %vm951, %v1018, %v1020
  %v1022 = vrot.slane %v837, 1
  %v1023 = vrot.slane %v672, 1
  %v1024 = vsel %vm951, %v1022, %v1023
  %v1025 = vrot.slane %v870, 1
  %v1026 = vsel %vm951, %v1023, %v1025
  %v1027 = vrot.slane %v838, 1
  %v1028 = vrot.slane %v675, 1
  %v1029 = vsel %vm951, %v1027, %v1028
  %v1030 = vrot.slane %v871, 1
  %v1031 = vsel %vm951, %v1028, %v1030
  %v1032 = vrot.slane %v840, 1
  %v1033 = vrot.slane %v681, 1
  %v1034 = vsel %vm951, %v1032, %v1033
  %v1035 = vrot.slane %v873, 1
  %v1036 = vsel %vm951, %v1033, %v1035
  %v1037 = vrot.slane %v841, 1
  %v1038 = vrot.slane %v684, 1
  %v1039 = vsel %vm951, %v1037, %v1038
  %v1040 = vrot.slane %v874, 1
  %v1041 = vsel %vm951, %v1038, %v1040
  %v1042 = vrot.slane %v842, 1
  %v1043 = vrot.slane %v687, 1
  %v1044 = vsel %vm951, %v1042, %v1043
  %v1045 = vrot.slane %v875, 1
  %v1046 = vsel %vm951, %v1043, %v1045
  %v1047 = vrot.slane %v843, 1
  %v1048 = vrot.slane %v690, 1
  %v1049 = vsel %vm951, %v1047, %v1048
  %v1050 = vrot.slane %v876, 1
  %v1051 = vsel %vm951, %v1048, %v1050
  %v1052 = vrot.slane %v844, 1
  %v1053 = vrot.slane %v693, 1
  %v1054 = vsel %vm951, %v1052, %v1053
  %v1055 = vrot.slane %v877, 1
  %v1056 = vsel %vm951, %v1053, %v1055
  %v1057 = vrot.slane %v845, 1
  %v1058 = vrot.slane %v696, 1
  %v1059 = vsel %vm951, %v1057, %v1058
  %v1060 = vrot.slane %v878, 1
  %v1061 = vsel %vm951, %v1058, %v1060
  %v1062 = vrot.slane %v846, 1
  %v1063 = vrot.slane %v699, 1
  %v1064 = vsel %vm951, %v1062, %v1063
  %v1065 = vrot.slane %v879, 1
  %v1066 = vsel %vm951, %v1063, %v1065
  %v1067 = vrot.slane %v847, 1
  %v1068 = vrot.slane %v702, 1
  %v1069 = vsel %vm951, %v1067, %v1068
  %v1070 = vrot.slane %v880, 1
  %v1071 = vsel %vm951, %v1068, %v1070
  %v1072 = vrot.slane %v848, 1
  %v1073 = vrot.slane %v705, 1
  %v1074 = vsel %vm951, %v1072, %v1073
  %v1075 = vrot.slane %v881, 1
  %v1076 = vsel %vm951, %v1073, %v1075
  %v1077 = vrot.slane %v849, 1
  %v1078 = vrot.slane %v708, 1
  %v1079 = vsel %vm951, %v1077, %v1078
  %v1080 = vrot.slane %v882, 1
  %v1081 = vsel %vm951, %v1078, %v1080
  %v1082 = vrot.slane %v850, 1
  %v1083 = vrot.slane %v711, 1
  %v1084 = vsel %vm951, %v1082, %v1083
  %v1085 = vrot.slane %v883, 1
  %v1086 = vsel %vm951, %v1083, %v1085
  %v1087 = vrot.slane %v851, 1
  %v1088 = vrot.slane %v714, 1
  %v1089 = vsel %vm951, %v1087, %v1088
  %v1090 = vrot.slane %v884, 1
  %v1091 = vsel %vm951, %v1088, %v1090
  %v1092 = vrot.slane %v852, 1
  %v1093 = vrot.slane %v717, 1
  %v1094 = vsel %vm951, %v1092, %v1093
  %v1095 = vrot.slane %v885, 1
  %v1096 = vsel %vm951, %v1093, %v1095
  %v1097 = vrot.slane %v853, 1
  %v1098 = vrot.slane %v720, 1
  %v1099 = vsel %vm951, %v1097, %v1098
  %v1100 = vrot.slane %v886, 1
  %v1101 = vsel %vm951, %v1098, %v1100
  %v1102 = vrot.slane %v854, 1
  %v1103 = vrot.slane %v723, 1
  %v1104 = vsel %vm951, %v1102, %v1103
  %v1105 = vrot.slane %v887, 1
  %v1106 = vsel %vm951, %v1103, %v1105
  %1107 = vrot.lane.b32.xlu0 %v954, 32
  %v1108 = vpop.permute.xlu0 %1107
  %1109 = vrot.lane.b32.xlu0 %v956, 32
  %v1110 = vpop.permute.xlu0 %1109
  %1111 = vrot.lane.b32.xlu0 %v959, 32
  %v1112 = vpop.permute.xlu0 %1111
  %1113 = vrot.lane.b32.xlu0 %v961, 32
  %v1114 = vpop.permute.xlu0 %1113
  %1115 = vrot.lane.b32.xlu0 %v964, 32
  %v1116 = vpop.permute.xlu0 %1115
  %1117 = vrot.lane.b32.xlu0 %v966, 32
  %v1118 = vpop.permute.xlu0 %1117
  %1119 = vrot.lane.b32.xlu0 %v969, 32
  %v1120 = vpop.permute.xlu0 %1119
  %1121 = vrot.lane.b32.xlu0 %v971, 32
  %v1122 = vpop.permute.xlu0 %1121
  %1123 = vrot.lane.b32.xlu0 %v974, 32
  %v1124 = vpop.permute.xlu0 %1123
  %1125 = vrot.lane.b32.xlu0 %v976, 32
  %v1126 = vpop.permute.xlu0 %1125
  %1127 = vrot.lane.b32.xlu0 %v979, 32
  %v1128 = vpop.permute.xlu0 %1127
  %1129 = vrot.lane.b32.xlu0 %v981, 32
  %v1130 = vpop.permute.xlu0 %1129
  %1131 = vrot.lane.b32.xlu0 %v984, 32
  %v1132 = vpop.permute.xlu0 %1131
  %1133 = vrot.lane.b32.xlu0 %v986, 32
  %v1134 = vpop.permute.xlu0 %1133
  %1135 = vrot.lane.b32.xlu0 %v989, 32
  %v1136 = vpop.permute.xlu0 %1135
  %1137 = vrot.lane.b32.xlu0 %v991, 32
  %v1138 = vpop.permute.xlu0 %1137
  %1139 = vrot.lane.b32.xlu0 %v994, 32
  %v1140 = vpop.permute.xlu0 %1139
  %1141 = vrot.lane.b32.xlu0 %v996, 32
  %v1142 = vpop.permute.xlu0 %1141
  %1143 = vrot.lane.b32.xlu0 %v999, 32
  %v1144 = vpop.permute.xlu0 %1143
  %1145 = vrot.lane.b32.xlu0 %v1001, 32
  %v1146 = vpop.permute.xlu0 %1145
  %1147 = vrot.lane.b32.xlu0 %v1004, 32
  %v1148 = vpop.permute.xlu0 %1147
  %1149 = vrot.lane.b32.xlu0 %v1006, 32
  %v1150 = vpop.permute.xlu0 %1149
  %1151 = vrot.lane.b32.xlu0 %v1009, 32
  %v1152 = vpop.permute.xlu0 %1151
  %1153 = vrot.lane.b32.xlu0 %v1011, 32
  %v1154 = vpop.permute.xlu0 %1153
  %1155 = vrot.lane.b32.xlu0 %v1014, 32
  %v1156 = vpop.permute.xlu0 %1155
  %1157 = vrot.lane.b32.xlu0 %v1016, 32
  %v1158 = vpop.permute.xlu0 %1157
  %1159 = vrot.lane.b32.xlu0 %v1019, 32
  %v1160 = vpop.permute.xlu0 %1159
  %1161 = vrot.lane.b32.xlu0 %v1021, 32
  %v1162 = vpop.permute.xlu0 %1161
  %1163 = vrot.lane.b32.xlu0 %v1024, 32
  %v1164 = vpop.permute.xlu0 %1163
  %1165 = vrot.lane.b32.xlu0 %v1026, 32
  %v1166 = vpop.permute.xlu0 %1165
  %1167 = vrot.lane.b32.xlu0 %v1029, 32
  %v1168 = vpop.permute.xlu0 %1167
  %1169 = vrot.lane.b32.xlu0 %v1031, 32
  %v1170 = vpop.permute.xlu0 %1169
  %1171 = vrot.lane.b32.xlu0 %v1034, 32
  %v1172 = vpop.permute.xlu0 %1171
  %1173 = vrot.lane.b32.xlu0 %v1036, 32
  %v1174 = vpop.permute.xlu0 %1173
  %1175 = vrot.lane.b32.xlu0 %v1039, 32
  %v1176 = vpop.permute.xlu0 %1175
  %1177 = vrot.lane.b32.xlu0 %v1041, 32
  %v1178 = vpop.permute.xlu0 %1177
  %1179 = vrot.lane.b32.xlu0 %v1044, 32
  %v1180 = vpop.permute.xlu0 %1179
  %1181 = vrot.lane.b32.xlu0 %v1046, 32
  %v1182 = vpop.permute.xlu0 %1181
  %1183 = vrot.lane.b32.xlu0 %v1049, 32
  %v1184 = vpop.permute.xlu0 %1183
  %1185 = vrot.lane.b32.xlu0 %v1051, 32
  %v1186 = vpop.permute.xlu0 %1185
  %1187 = vrot.lane.b32.xlu0 %v1054, 32
  %v1188 = vpop.permute.xlu0 %1187
  %1189 = vrot.lane.b32.xlu0 %v1056, 32
  %v1190 = vpop.permute.xlu0 %1189
  %1191 = vrot.lane.b32.xlu0 %v1059, 32
  %v1192 = vpop.permute.xlu0 %1191
  %1193 = vrot.lane.b32.xlu0 %v1061, 32
  %v1194 = vpop.permute.xlu0 %1193
  %1195 = vrot.lane.b32.xlu0 %v1064, 32
  %v1196 = vpop.permute.xlu0 %1195
  %1197 = vrot.lane.b32.xlu0 %v1066, 32
  %v1198 = vpop.permute.xlu0 %1197
  %1199 = vrot.lane.b32.xlu0 %v1069, 32
  %v1200 = vpop.permute.xlu0 %1199
  %1201 = vrot.lane.b32.xlu0 %v1071, 32
  %v1202 = vpop.permute.xlu0 %1201
  %1203 = vrot.lane.b32.xlu0 %v1074, 32
  %v1204 = vpop.permute.xlu0 %1203
  %1205 = vrot.lane.b32.xlu0 %v1076, 32
  %v1206 = vpop.permute.xlu0 %1205
  %1207 = vrot.lane.b32.xlu0 %v1079, 32
  %v1208 = vpop.permute.xlu0 %1207
  %1209 = vrot.lane.b32.xlu0 %v1081, 32
  %v1210 = vpop.permute.xlu0 %1209
  %1211 = vrot.lane.b32.xlu0 %v1084, 32
  %v1212 = vpop.permute.xlu0 %1211
  %1213 = vrot.lane.b32.xlu0 %v1086, 32
  %v1214 = vpop.permute.xlu0 %1213
  %1215 = vrot.lane.b32.xlu0 %v1089, 32
  %v1216 = vpop.permute.xlu0 %1215
  %1217 = vrot.lane.b32.xlu0 %v1091, 32
  %v1218 = vpop.permute.xlu0 %1217
  %1219 = vrot.lane.b32.xlu0 %v1094, 32
  %v1220 = vpop.permute.xlu0 %1219
  %1221 = vrot.lane.b32.xlu0 %v1096, 32
  %v1222 = vpop.permute.xlu0 %1221
  %1223 = vrot.lane.b32.xlu0 %v1099, 32
  %v1224 = vpop.permute.xlu0 %1223
  %1225 = vrot.lane.b32.xlu0 %v1101, 32
  %v1226 = vpop.permute.xlu0 %1225
  %1227 = vrot.lane.b32.xlu0 %v1104, 32
  %v1228 = vpop.permute.xlu0 %1227
  %1229 = vrot.lane.b32.xlu0 %v1106, 32
  %v1230 = vpop.permute.xlu0 %1229
  %vm1293 = vcmask 1045504
  %v1294 = vrot.slane %v823, 2
  %v1295 = vrot.slane %v630, 2
  %v1296 = vsel %vm1293, %v1294, %v1295
  %v1297 = vrot.slane %v856, 2
  %v1298 = vsel %vm1293, %v1295, %v1297
  %v1299 = vrot.slane %v824, 2
  %v1300 = vrot.slane %v633, 2
  %v1301 = vsel %vm1293, %v1299, %v1300
  %v1302 = vrot.slane %v857, 2
  %v1303 = vsel %vm1293, %v1300, %v1302
  %v1304 = vrot.slane %v825, 2
  %v1305 = vrot.slane %v636, 2
  %v1306 = vsel %vm1293, %v1304, %v1305
  %v1307 = vrot.slane %v858, 2
  %v1308 = vsel %vm1293, %v1305, %v1307
  %v1309 = vrot.slane %v826, 2
  %v1310 = vrot.slane %v639, 2
  %v1311 = vsel %vm1293, %v1309, %v1310
  %v1312 = vrot.slane %v859, 2
  %v1313 = vsel %vm1293, %v1310, %v1312
  %v1314 = vrot.slane %v827, 2
  %v1315 = vrot.slane %v642, 2
  %v1316 = vsel %vm1293, %v1314, %v1315
  %v1317 = vrot.slane %v860, 2
  %v1318 = vsel %vm1293, %v1315, %v1317
  %v1319 = vrot.slane %v828, 2
  %v1320 = vrot.slane %v645, 2
  %v1321 = vsel %vm1293, %v1319, %v1320
  %v1322 = vrot.slane %v861, 2
  %v1323 = vsel %vm1293, %v1320, %v1322
  %v1324 = vrot.slane %v829, 2
  %v1325 = vrot.slane %v648, 2
  %v1326 = vsel %vm1293, %v1324, %v1325
  %v1327 = vrot.slane %v862, 2
  %v1328 = vsel %vm1293, %v1325, %v1327
  %v1329 = vrot.slane %v830, 2
  %v1330 = vrot.slane %v651, 2
  %v1331 = vsel %vm1293, %v1329, %v1330
  %v1332 = vrot.slane %v863, 2
  %v1333 = vsel %vm1293, %v1330, %v1332
  %v1334 = vrot.slane %v831, 2
  %v1335 = vrot.slane %v654, 2
  %v1336 = vsel %vm1293, %v1334, %v1335
  %v1337 = vrot.slane %v864, 2
  %v1338 = vsel %vm1293, %v1335, %v1337
  %v1339 = vrot.slane %v832, 2
  %v1340 = vrot.slane %v657, 2
  %v1341 = vsel %vm1293, %v1339, %v1340
  %v1342 = vrot.slane %v865, 2
  %v1343 = vsel %vm1293, %v1340, %v1342
  %v1344 = vrot.slane %v833, 2
  %v1345 = vrot.slane %v660, 2
  %v1346 = vsel %vm1293, %v1344, %v1345
  %v1347 = vrot.slane %v866, 2
  %v1348 = vsel %vm1293, %v1345, %v1347
  %v1349 = vrot.slane %v834, 2
  %v1350 = vrot.slane %v663, 2
  %v1351 = vsel %vm1293, %v1349, %v1350
  %v1352 = vrot.slane %v867, 2
  %v1353 = vsel %vm1293, %v1350, %v1352
  %v1354 = vrot.slane %v835, 2
  %v1355 = vrot.slane %v666, 2
  %v1356 = vsel %vm1293, %v1354, %v1355
  %v1357 = vrot.slane %v868, 2
  %v1358 = vsel %vm1293, %v1355, %v1357
  %v1359 = vrot.slane %v836, 2
  %v1360 = vrot.slane %v669, 2
  %v1361 = vsel %vm1293, %v1359, %v1360
  %v1362 = vrot.slane %v869, 2
  %v1363 = vsel %vm1293, %v1360, %v1362
  %v1364 = vrot.slane %v837, 2
  %v1365 = vrot.slane %v672, 2
  %v1366 = vsel %vm1293, %v1364, %v1365
  %v1367 = vrot.slane %v870, 2
  %v1368 = vsel %vm1293, %v1365, %v1367
  %v1369 = vrot.slane %v838, 2
  %v1370 = vrot.slane %v675, 2
  %v1371 = vsel %vm1293, %v1369, %v1370
  %v1372 = vrot.slane %v871, 2
  %v1373 = vsel %vm1293, %v1370, %v1372
  %v1374 = vrot.slane %v840, 2
  %v1375 = vrot.slane %v681, 2
  %v1376 = vsel %vm1293, %v1374, %v1375
  %v1377 = vrot.slane %v873, 2
  %v1378 = vsel %vm1293, %v1375, %v1377
  %v1379 = vrot.slane %v841, 2
  %v1380 = vrot.slane %v684, 2
  %v1381 = vsel %vm1293, %v1379, %v1380
  %v1382 = vrot.slane %v874, 2
  %v1383 = vsel %vm1293, %v1380, %v1382
  %v1384 = vrot.slane %v842, 2
  %v1385 = vrot.slane %v687, 2
  %v1386 = vsel %vm1293, %v1384, %v1385
  %v1387 = vrot.slane %v875, 2
  %v1388 = vsel %vm1293, %v1385, %v1387
  %v1389 = vrot.slane %v843, 2
  %v1390 = vrot.slane %v690, 2
  %v1391 = vsel %vm1293, %v1389, %v1390
  %v1392 = vrot.slane %v876, 2
  %v1393 = vsel %vm1293, %v1390, %v1392
  %v1394 = vrot.slane %v844, 2
  %v1395 = vrot.slane %v693, 2
  %v1396 = vsel %vm1293, %v1394, %v1395
  %v1397 = vrot.slane %v877, 2
  %v1398 = vsel %vm1293, %v1395, %v1397
  %v1399 = vrot.slane %v845, 2
  %v1400 = vrot.slane %v696, 2
  %v1401 = vsel %vm1293, %v1399, %v1400
  %v1402 = vrot.slane %v878, 2
  %v1403 = vsel %vm1293, %v1400, %v1402
  %v1404 = vrot.slane %v846, 2
  %v1405 = vrot.slane %v699, 2
  %v1406 = vsel %vm1293, %v1404, %v1405
  %v1407 = vrot.slane %v879, 2
  %v1408 = vsel %vm1293, %v1405, %v1407
  %v1409 = vrot.slane %v847, 2
  %v1410 = vrot.slane %v702, 2
  %v1411 = vsel %vm1293, %v1409, %v1410
  %v1412 = vrot.slane %v880, 2
  %v1413 = vsel %vm1293, %v1410, %v1412
  %v1414 = vrot.slane %v848, 2
  %v1415 = vrot.slane %v705, 2
  %v1416 = vsel %vm1293, %v1414, %v1415
  %v1417 = vrot.slane %v881, 2
  %v1418 = vsel %vm1293, %v1415, %v1417
  %v1419 = vrot.slane %v849, 2
  %v1420 = vrot.slane %v708, 2
  %v1421 = vsel %vm1293, %v1419, %v1420
  %v1422 = vrot.slane %v882, 2
  %v1423 = vsel %vm1293, %v1420, %v1422
  %v1424 = vrot.slane %v850, 2
  %v1425 = vrot.slane %v711, 2
  %v1426 = vsel %vm1293, %v1424, %v1425
  %v1427 = vrot.slane %v883, 2
  %v1428 = vsel %vm1293, %v1425, %v1427
  %v1429 = vrot.slane %v851, 2
  %v1430 = vrot.slane %v714, 2
  %v1431 = vsel %vm1293, %v1429, %v1430
  %v1432 = vrot.slane %v884, 2
  %v1433 = vsel %vm1293, %v1430, %v1432
  %v1434 = vrot.slane %v852, 2
  %v1435 = vrot.slane %v717, 2
  %v1436 = vsel %vm1293, %v1434, %v1435
  %v1437 = vrot.slane %v885, 2
  %v1438 = vsel %vm1293, %v1435, %v1437
  %v1439 = vrot.slane %v853, 2
  %v1440 = vrot.slane %v720, 2
  %v1441 = vsel %vm1293, %v1439, %v1440
  %v1442 = vrot.slane %v886, 2
  %v1443 = vsel %vm1293, %v1440, %v1442
  %v1444 = vrot.slane %v854, 2
  %v1445 = vrot.slane %v723, 2
  %v1446 = vsel %vm1293, %v1444, %v1445
  %v1447 = vrot.slane %v887, 2
  %v1448 = vsel %vm1293, %v1445, %v1447
  %1449 = vrot.lane.b32.xlu0 %v1296, 64
  %v1450 = vpop.permute.xlu0 %1449
  %1451 = vrot.lane.b32.xlu0 %v1298, 64
  %v1452 = vpop.permute.xlu0 %1451
  %1453 = vrot.lane.b32.xlu0 %v1301, 64
  %v1454 = vpop.permute.xlu0 %1453
  %1455 = vrot.lane.b32.xlu0 %v1303, 64
  %v1456 = vpop.permute.xlu0 %1455
  %1457 = vrot.lane.b32.xlu0 %v1306, 64
  %v1458 = vpop.permute.xlu0 %1457
  %1459 = vrot.lane.b32.xlu0 %v1308, 64
  %v1460 = vpop.permute.xlu0 %1459
  %1461 = vrot.lane.b32.xlu0 %v1311, 64
  %v1462 = vpop.permute.xlu0 %1461
  %1463 = vrot.lane.b32.xlu0 %v1313, 64
  %v1464 = vpop.permute.xlu0 %1463
  %1465 = vrot.lane.b32.xlu0 %v1316, 64
  %v1466 = vpop.permute.xlu0 %1465
  %1467 = vrot.lane.b32.xlu0 %v1318, 64
  %v1468 = vpop.permute.xlu0 %1467
  %1469 = vrot.lane.b32.xlu0 %v1321, 64
  %v1470 = vpop.permute.xlu0 %1469
  %1471 = vrot.lane.b32.xlu0 %v1323, 64
  %v1472 = vpop.permute.xlu0 %1471
  %1473 = vrot.lane.b32.xlu0 %v1326, 64
  %v1474 = vpop.permute.xlu0 %1473
  %1475 = vrot.lane.b32.xlu0 %v1328, 64
  %v1476 = vpop.permute.xlu0 %1475
  %1477 = vrot.lane.b32.xlu0 %v1331, 64
  %v1478 = vpop.permute.xlu0 %1477
  %1479 = vrot.lane.b32.xlu0 %v1333, 64
  %v1480 = vpop.permute.xlu0 %1479
  %1481 = vrot.lane.b32.xlu0 %v1336, 64
  %v1482 = vpop.permute.xlu0 %1481
  %1483 = vrot.lane.b32.xlu0 %v1338, 64
  %v1484 = vpop.permute.xlu0 %1483
  %1485 = vrot.lane.b32.xlu0 %v1341, 64
  %v1486 = vpop.permute.xlu0 %1485
  %1487 = vrot.lane.b32.xlu0 %v1343, 64
  %v1488 = vpop.permute.xlu0 %1487
  %1489 = vrot.lane.b32.xlu0 %v1346, 64
  %v1490 = vpop.permute.xlu0 %1489
  %1491 = vrot.lane.b32.xlu0 %v1348, 64
  %v1492 = vpop.permute.xlu0 %1491
  %1493 = vrot.lane.b32.xlu0 %v1351, 64
  %v1494 = vpop.permute.xlu0 %1493
  %1495 = vrot.lane.b32.xlu0 %v1353, 64
  %v1496 = vpop.permute.xlu0 %1495
  %1497 = vrot.lane.b32.xlu0 %v1356, 64
  %v1498 = vpop.permute.xlu0 %1497
  %1499 = vrot.lane.b32.xlu0 %v1358, 64
  %v1500 = vpop.permute.xlu0 %1499
  %1501 = vrot.lane.b32.xlu0 %v1361, 64
  %v1502 = vpop.permute.xlu0 %1501
  %1503 = vrot.lane.b32.xlu0 %v1363, 64
  %v1504 = vpop.permute.xlu0 %1503
  %1505 = vrot.lane.b32.xlu0 %v1366, 64
  %v1506 = vpop.permute.xlu0 %1505
  %1507 = vrot.lane.b32.xlu0 %v1368, 64
  %v1508 = vpop.permute.xlu0 %1507
  %1509 = vrot.lane.b32.xlu0 %v1371, 64
  %v1510 = vpop.permute.xlu0 %1509
  %1511 = vrot.lane.b32.xlu0 %v1373, 64
  %v1512 = vpop.permute.xlu0 %1511
  %1513 = vrot.lane.b32.xlu0 %v1376, 64
  %v1514 = vpop.permute.xlu0 %1513
  %1515 = vrot.lane.b32.xlu0 %v1378, 64
  %v1516 = vpop.permute.xlu0 %1515
  %1517 = vrot.lane.b32.xlu0 %v1381, 64
  %v1518 = vpop.permute.xlu0 %1517
  %1519 = vrot.lane.b32.xlu0 %v1383, 64
  %v1520 = vpop.permute.xlu0 %1519
  %1521 = vrot.lane.b32.xlu0 %v1386, 64
  %v1522 = vpop.permute.xlu0 %1521
  %1523 = vrot.lane.b32.xlu0 %v1388, 64
  %v1524 = vpop.permute.xlu0 %1523
  %1525 = vrot.lane.b32.xlu0 %v1391, 64
  %v1526 = vpop.permute.xlu0 %1525
  %1527 = vrot.lane.b32.xlu0 %v1393, 64
  %v1528 = vpop.permute.xlu0 %1527
  %1529 = vrot.lane.b32.xlu0 %v1396, 64
  %v1530 = vpop.permute.xlu0 %1529
  %1531 = vrot.lane.b32.xlu0 %v1398, 64
  %v1532 = vpop.permute.xlu0 %1531
  %1533 = vrot.lane.b32.xlu0 %v1401, 64
  %v1534 = vpop.permute.xlu0 %1533
  %1535 = vrot.lane.b32.xlu0 %v1403, 64
  %v1536 = vpop.permute.xlu0 %1535
  %1537 = vrot.lane.b32.xlu0 %v1406, 64
  %v1538 = vpop.permute.xlu0 %1537
  %1539 = vrot.lane.b32.xlu0 %v1408, 64
  %v1540 = vpop.permute.xlu0 %1539
  %1541 = vrot.lane.b32.xlu0 %v1411, 64
  %v1542 = vpop.permute.xlu0 %1541
  %1543 = vrot.lane.b32.xlu0 %v1413, 64
  %v1544 = vpop.permute.xlu0 %1543
  %1545 = vrot.lane.b32.xlu0 %v1416, 64
  %v1546 = vpop.permute.xlu0 %1545
  %1547 = vrot.lane.b32.xlu0 %v1418, 64
  %v1548 = vpop.permute.xlu0 %1547
  %1549 = vrot.lane.b32.xlu0 %v1421, 64
  %v1550 = vpop.permute.xlu0 %1549
  %1551 = vrot.lane.b32.xlu0 %v1423, 64
  %v1552 = vpop.permute.xlu0 %1551
  %1553 = vrot.lane.b32.xlu0 %v1426, 64
  %v1554 = vpop.permute.xlu0 %1553
  %1555 = vrot.lane.b32.xlu0 %v1428, 64
  %v1556 = vpop.permute.xlu0 %1555
  %1557 = vrot.lane.b32.xlu0 %v1431, 64
  %v1558 = vpop.permute.xlu0 %1557
  %1559 = vrot.lane.b32.xlu0 %v1433, 64
  %v1560 = vpop.permute.xlu0 %1559
  %1561 = vrot.lane.b32.xlu0 %v1436, 64
  %v1562 = vpop.permute.xlu0 %1561
  %1563 = vrot.lane.b32.xlu0 %v1438, 64
  %v1564 = vpop.permute.xlu0 %1563
  %1565 = vrot.lane.b32.xlu0 %v1441, 64
  %v1566 = vpop.permute.xlu0 %1565
  %1567 = vrot.lane.b32.xlu0 %v1443, 64
  %v1568 = vpop.permute.xlu0 %1567
  %1569 = vrot.lane.b32.xlu0 %v1446, 64
  %v1570 = vpop.permute.xlu0 %1569
  %1571 = vrot.lane.b32.xlu0 %v1448, 64
  %v1572 = vpop.permute.xlu0 %1571
  %1637 = vrot.lane.b32.xlu0 %v824, 96
  %v1638 = vpop.permute.xlu0 %1637
  %1639 = vrot.lane.b32.xlu0 %v633, 96
  %v1640 = vpop.permute.xlu0 %1639
  %1641 = vrot.lane.b32.xlu0 %v825, 96
  %v1642 = vpop.permute.xlu0 %1641
  %1643 = vrot.lane.b32.xlu0 %v636, 96
  %v1644 = vpop.permute.xlu0 %1643
  %1645 = vrot.lane.b32.xlu0 %v826, 96
  %v1646 = vpop.permute.xlu0 %1645
  %1647 = vrot.lane.b32.xlu0 %v639, 96
  %v1648 = vpop.permute.xlu0 %1647
  %1649 = vrot.lane.b32.xlu0 %v827, 96
  %v1650 = vpop.permute.xlu0 %1649
  %1651 = vrot.lane.b32.xlu0 %v642, 96
  %v1652 = vpop.permute.xlu0 %1651
  %1653 = vrot.lane.b32.xlu0 %v828, 96
  %v1654 = vpop.permute.xlu0 %1653
  %1655 = vrot.lane.b32.xlu0 %v645, 96
  %v1656 = vpop.permute.xlu0 %1655
  %1657 = vrot.lane.b32.xlu0 %v829, 96
  %v1658 = vpop.permute.xlu0 %1657
  %1659 = vrot.lane.b32.xlu0 %v648, 96
  %v1660 = vpop.permute.xlu0 %1659
  %1661 = vrot.lane.b32.xlu0 %v830, 96
  %v1662 = vpop.permute.xlu0 %1661
  %1663 = vrot.lane.b32.xlu0 %v651, 96
  %v1664 = vpop.permute.xlu0 %1663
  %1665 = vrot.lane.b32.xlu0 %v831, 96
  %v1666 = vpop.permute.xlu0 %1665
  %1667 = vrot.lane.b32.xlu0 %v654, 96
  %v1668 = vpop.permute.xlu0 %1667
  %1669 = vrot.lane.b32.xlu0 %v832, 96
  %v1670 = vpop.permute.xlu0 %1669
  %1671 = vrot.lane.b32.xlu0 %v657, 96
  %v1672 = vpop.permute.xlu0 %1671
  %1673 = vrot.lane.b32.xlu0 %v833, 96
  %v1674 = vpop.permute.xlu0 %1673
  %1675 = vrot.lane.b32.xlu0 %v660, 96
  %v1676 = vpop.permute.xlu0 %1675
  %1677 = vrot.lane.b32.xlu0 %v834, 96
  %v1678 = vpop.permute.xlu0 %1677
  %1679 = vrot.lane.b32.xlu0 %v663, 96
  %v1680 = vpop.permute.xlu0 %1679
  %1681 = vrot.lane.b32.xlu0 %v835, 96
  %v1682 = vpop.permute.xlu0 %1681
  %1683 = vrot.lane.b32.xlu0 %v666, 96
  %v1684 = vpop.permute.xlu0 %1683
  %1685 = vrot.lane.b32.xlu0 %v836, 96
  %v1686 = vpop.permute.xlu0 %1685
  %1687 = vrot.lane.b32.xlu0 %v669, 96
  %v1688 = vpop.permute.xlu0 %1687
  %1689 = vrot.lane.b32.xlu0 %v837, 96
  %v1690 = vpop.permute.xlu0 %1689
  %1691 = vrot.lane.b32.xlu0 %v672, 96
  %v1692 = vpop.permute.xlu0 %1691
  %1693 = vrot.lane.b32.xlu0 %v838, 96
  %v1694 = vpop.permute.xlu0 %1693
  %1695 = vrot.lane.b32.xlu0 %v675, 96
  %v1696 = vpop.permute.xlu0 %1695
  %1697 = vrot.lane.b32.xlu0 %v839, 96
  %v1698 = vpop.permute.xlu0 %1697
  %1699 = vrot.lane.b32.xlu0 %v678, 96
  %v1700 = vpop.permute.xlu0 %1699
  %1701 = vrot.lane.b32.xlu0 %v840, 96
  %v1702 = vpop.permute.xlu0 %1701
  %1703 = vrot.lane.b32.xlu0 %v681, 96
  %v1704 = vpop.permute.xlu0 %1703
  %1705 = vrot.lane.b32.xlu0 %v841, 96
  %v1706 = vpop.permute.xlu0 %1705
  %1707 = vrot.lane.b32.xlu0 %v684, 96
  %v1708 = vpop.permute.xlu0 %1707
  %1709 = vrot.lane.b32.xlu0 %v842, 96
  %v1710 = vpop.permute.xlu0 %1709
  %1711 = vrot.lane.b32.xlu0 %v687, 96
  %v1712 = vpop.permute.xlu0 %1711
  %1713 = vrot.lane.b32.xlu0 %v843, 96
  %v1714 = vpop.permute.xlu0 %1713
  %1715 = vrot.lane.b32.xlu0 %v690, 96
  %v1716 = vpop.permute.xlu0 %1715
  %1717 = vrot.lane.b32.xlu0 %v844, 96
  %v1718 = vpop.permute.xlu0 %1717
  %1719 = vrot.lane.b32.xlu0 %v693, 96
  %v1720 = vpop.permute.xlu0 %1719
  %1721 = vrot.lane.b32.xlu0 %v845, 96
  %v1722 = vpop.permute.xlu0 %1721
  %1723 = vrot.lane.b32.xlu0 %v696, 96
  %v1724 = vpop.permute.xlu0 %1723
  %1725 = vrot.lane.b32.xlu0 %v846, 96
  %v1726 = vpop.permute.xlu0 %1725
  %1727 = vrot.lane.b32.xlu0 %v699, 96
  %v1728 = vpop.permute.xlu0 %1727
  %1729 = vrot.lane.b32.xlu0 %v847, 96
  %v1730 = vpop.permute.xlu0 %1729
  %1731 = vrot.lane.b32.xlu0 %v702, 96
  %v1732 = vpop.permute.xlu0 %1731
  %1733 = vrot.lane.b32.xlu0 %v848, 96
  %v1734 = vpop.permute.xlu0 %1733
  %1735 = vrot.lane.b32.xlu0 %v705, 96
  %v1736 = vpop.permute.xlu0 %1735
  %1737 = vrot.lane.b32.xlu0 %v849, 96
  %v1738 = vpop.permute.xlu0 %1737
  %1739 = vrot.lane.b32.xlu0 %v708, 96
  %v1740 = vpop.permute.xlu0 %1739
  %1741 = vrot.lane.b32.xlu0 %v850, 96
  %v1742 = vpop.permute.xlu0 %1741
  %1743 = vrot.lane.b32.xlu0 %v711, 96
  %v1744 = vpop.permute.xlu0 %1743
  %1745 = vrot.lane.b32.xlu0 %v851, 96
  %v1746 = vpop.permute.xlu0 %1745
  %1747 = vrot.lane.b32.xlu0 %v714, 96
  %v1748 = vpop.permute.xlu0 %1747
  %1749 = vrot.lane.b32.xlu0 %v852, 96
  %v1750 = vpop.permute.xlu0 %1749
  %1751 = vrot.lane.b32.xlu0 %v717, 96
  %v1752 = vpop.permute.xlu0 %1751
  %1753 = vrot.lane.b32.xlu0 %v853, 96
  %v1754 = vpop.permute.xlu0 %1753
  %1755 = vrot.lane.b32.xlu0 %v720, 96
  %v1756 = vpop.permute.xlu0 %1755
  %1757 = vrot.lane.b32.xlu0 %v854, 96
  %v1758 = vpop.permute.xlu0 %1757
  %1759 = vrot.lane.b32.xlu0 %v723, 96
  %v1760 = vpop.permute.xlu0 %1759
  %1761 = vrot.lane.b32.xlu0 %v855, 96
  %v1762 = vpop.permute.xlu0 %1761
  %1763 = vrot.lane.b32.xlu0 %v726, 96
  %v1764 = vpop.permute.xlu0 %1763
  %v1831 = vrot.slane %v839, 1
  %v1832 = vrot.slane %v678, 1
  %v1833 = vsel %vm951, %v1831, %v1832
  %v1834 = vrot.slane %v872, 1
  %v1835 = vsel %vm951, %v1832, %v1834
  %v1836 = vrot.slane %v855, 1
  %v1837 = vrot.slane %v726, 1
  %v1838 = vsel %vm951, %v1836, %v1837
  %v1839 = vrot.slane %v888, 1
  %v1840 = vsel %vm951, %v1837, %v1839
  %v1905 = vrot.slane %v839, 2
  %v1906 = vrot.slane %v678, 2
  %v1907 = vsel %vm1293, %v1905, %v1906
  %v1908 = vrot.slane %v872, 2
  %v1909 = vsel %vm1293, %v1906, %v1908
  %v1910 = vrot.slane %v855, 2
  %v1911 = vrot.slane %v726, 2
  %v1912 = vsel %vm1293, %v1910, %v1911
  %v1913 = vrot.slane %v888, 2
  %v1914 = vsel %vm1293, %v1911, %v1913
  %1915 = vrot.lane.b32.xlu0 %v1301, 32
  %v1916 = vpop.permute.xlu0 %1915
  %1917 = vrot.lane.b32.xlu0 %v1303, 32
  %v1918 = vpop.permute.xlu0 %1917
  %1919 = vrot.lane.b32.xlu0 %v1306, 32
  %v1920 = vpop.permute.xlu0 %1919
  %1921 = vrot.lane.b32.xlu0 %v1308, 32
  %v1922 = vpop.permute.xlu0 %1921
  %1923 = vrot.lane.b32.xlu0 %v1311, 32
  %v1924 = vpop.permute.xlu0 %1923
  %1925 = vrot.lane.b32.xlu0 %v1313, 32
  %v1926 = vpop.permute.xlu0 %1925
  %1927 = vrot.lane.b32.xlu0 %v1316, 32
  %v1928 = vpop.permute.xlu0 %1927
  %1929 = vrot.lane.b32.xlu0 %v1318, 32
  %v1930 = vpop.permute.xlu0 %1929
  %1931 = vrot.lane.b32.xlu0 %v1321, 32
  %v1932 = vpop.permute.xlu0 %1931
  %1933 = vrot.lane.b32.xlu0 %v1323, 32
  %v1934 = vpop.permute.xlu0 %1933
  %1935 = vrot.lane.b32.xlu0 %v1326, 32
  %v1936 = vpop.permute.xlu0 %1935
  %1937 = vrot.lane.b32.xlu0 %v1328, 32
  %v1938 = vpop.permute.xlu0 %1937
  %1939 = vrot.lane.b32.xlu0 %v1331, 32
  %v1940 = vpop.permute.xlu0 %1939
  %1941 = vrot.lane.b32.xlu0 %v1333, 32
  %v1942 = vpop.permute.xlu0 %1941
  %1943 = vrot.lane.b32.xlu0 %v1336, 32
  %v1944 = vpop.permute.xlu0 %1943
  %1945 = vrot.lane.b32.xlu0 %v1338, 32
  %v1946 = vpop.permute.xlu0 %1945
  %1947 = vrot.lane.b32.xlu0 %v1341, 32
  %v1948 = vpop.permute.xlu0 %1947
  %1949 = vrot.lane.b32.xlu0 %v1343, 32
  %v1950 = vpop.permute.xlu0 %1949
  %1951 = vrot.lane.b32.xlu0 %v1346, 32
  %v1952 = vpop.permute.xlu0 %1951
  %1953 = vrot.lane.b32.xlu0 %v1348, 32
  %v1954 = vpop.permute.xlu0 %1953
  %1955 = vrot.lane.b32.xlu0 %v1351, 32
  %v1956 = vpop.permute.xlu0 %1955
  %1957 = vrot.lane.b32.xlu0 %v1353, 32
  %v1958 = vpop.permute.xlu0 %1957
  %1959 = vrot.lane.b32.xlu0 %v1356, 32
  %v1960 = vpop.permute.xlu0 %1959
  %1961 = vrot.lane.b32.xlu0 %v1358, 32
  %v1962 = vpop.permute.xlu0 %1961
  %1963 = vrot.lane.b32.xlu0 %v1361, 32
  %v1964 = vpop.permute.xlu0 %1963
  %1965 = vrot.lane.b32.xlu0 %v1363, 32
  %v1966 = vpop.permute.xlu0 %1965
  %1967 = vrot.lane.b32.xlu0 %v1366, 32
  %v1968 = vpop.permute.xlu0 %1967
  %1969 = vrot.lane.b32.xlu0 %v1368, 32
  %v1970 = vpop.permute.xlu0 %1969
  %1971 = vrot.lane.b32.xlu0 %v1371, 32
  %v1972 = vpop.permute.xlu0 %1971
  %1973 = vrot.lane.b32.xlu0 %v1373, 32
  %v1974 = vpop.permute.xlu0 %1973
  %1975 = vrot.lane.b32.xlu0 %v1907, 32
  %v1976 = vpop.permute.xlu0 %1975
  %1977 = vrot.lane.b32.xlu0 %v1909, 32
  %v1978 = vpop.permute.xlu0 %1977
  %1979 = vrot.lane.b32.xlu0 %v1376, 32
  %v1980 = vpop.permute.xlu0 %1979
  %1981 = vrot.lane.b32.xlu0 %v1378, 32
  %v1982 = vpop.permute.xlu0 %1981
  %1983 = vrot.lane.b32.xlu0 %v1381, 32
  %v1984 = vpop.permute.xlu0 %1983
  %1985 = vrot.lane.b32.xlu0 %v1383, 32
  %v1986 = vpop.permute.xlu0 %1985
  %1987 = vrot.lane.b32.xlu0 %v1386, 32
  %v1988 = vpop.permute.xlu0 %1987
  %1989 = vrot.lane.b32.xlu0 %v1388, 32
  %v1990 = vpop.permute.xlu0 %1989
  %1991 = vrot.lane.b32.xlu0 %v1391, 32
  %v1992 = vpop.permute.xlu0 %1991
  %1993 = vrot.lane.b32.xlu0 %v1393, 32
  %v1994 = vpop.permute.xlu0 %1993
  %1995 = vrot.lane.b32.xlu0 %v1396, 32
  %v1996 = vpop.permute.xlu0 %1995
  %1997 = vrot.lane.b32.xlu0 %v1398, 32
  %v1998 = vpop.permute.xlu0 %1997
  %1999 = vrot.lane.b32.xlu0 %v1401, 32
  %v2000 = vpop.permute.xlu0 %1999
  %2001 = vrot.lane.b32.xlu0 %v1403, 32
  %v2002 = vpop.permute.xlu0 %2001
  %2003 = vrot.lane.b32.xlu0 %v1406, 32
  %v2004 = vpop.permute.xlu0 %2003
  %2005 = vrot.lane.b32.xlu0 %v1408, 32
  %v2006 = vpop.permute.xlu0 %2005
  %2007 = vrot.lane.b32.xlu0 %v1411, 32
  %v2008 = vpop.permute.xlu0 %2007
  %2009 = vrot.lane.b32.xlu0 %v1413, 32
  %v2010 = vpop.permute.xlu0 %2009
  %2011 = vrot.lane.b32.xlu0 %v1416, 32
  %v2012 = vpop.permute.xlu0 %2011
  %2013 = vrot.lane.b32.xlu0 %v1418, 32
  %v2014 = vpop.permute.xlu0 %2013
  %2015 = vrot.lane.b32.xlu0 %v1421, 32
  %v2016 = vpop.permute.xlu0 %2015
  %2017 = vrot.lane.b32.xlu0 %v1423, 32
  %v2018 = vpop.permute.xlu0 %2017
  %2019 = vrot.lane.b32.xlu0 %v1426, 32
  %v2020 = vpop.permute.xlu0 %2019
  %2021 = vrot.lane.b32.xlu0 %v1428, 32
  %v2022 = vpop.permute.xlu0 %2021
  %2023 = vrot.lane.b32.xlu0 %v1431, 32
  %v2024 = vpop.permute.xlu0 %2023
  %2025 = vrot.lane.b32.xlu0 %v1433, 32
  %v2026 = vpop.permute.xlu0 %2025
  %2027 = vrot.lane.b32.xlu0 %v1436, 32
  %v2028 = vpop.permute.xlu0 %2027
  %2029 = vrot.lane.b32.xlu0 %v1438, 32
  %v2030 = vpop.permute.xlu0 %2029
  %2031 = vrot.lane.b32.xlu0 %v1441, 32
  %v2032 = vpop.permute.xlu0 %2031
  %2033 = vrot.lane.b32.xlu0 %v1443, 32
  %v2034 = vpop.permute.xlu0 %2033
  %2035 = vrot.lane.b32.xlu0 %v1446, 32
  %v2036 = vpop.permute.xlu0 %2035
  %2037 = vrot.lane.b32.xlu0 %v1448, 32
  %v2038 = vpop.permute.xlu0 %2037
  %2039 = vrot.lane.b32.xlu0 %v1912, 32
  %v2040 = vpop.permute.xlu0 %2039
  %2041 = vrot.lane.b32.xlu0 %v1914, 32
  %v2042 = vpop.permute.xlu0 %2041
  %2107 = vrot.lane.b32.xlu0 %v825, 64
  %v2108 = vpop.permute.xlu0 %2107
  %2109 = vrot.lane.b32.xlu0 %v636, 64
  %v2110 = vpop.permute.xlu0 %2109
  %2111 = vrot.lane.b32.xlu0 %v826, 64
  %v2112 = vpop.permute.xlu0 %2111
  %2113 = vrot.lane.b32.xlu0 %v639, 64
  %v2114 = vpop.permute.xlu0 %2113
  %2115 = vrot.lane.b32.xlu0 %v827, 64
  %v2116 = vpop.permute.xlu0 %2115
  %2117 = vrot.lane.b32.xlu0 %v642, 64
  %v2118 = vpop.permute.xlu0 %2117
  %2119 = vrot.lane.b32.xlu0 %v828, 64
  %v2120 = vpop.permute.xlu0 %2119
  %2121 = vrot.lane.b32.xlu0 %v645, 64
  %v2122 = vpop.permute.xlu0 %2121
  %2123 = vrot.lane.b32.xlu0 %v829, 64
  %v2124 = vpop.permute.xlu0 %2123
  %2125 = vrot.lane.b32.xlu0 %v648, 64
  %v2126 = vpop.permute.xlu0 %2125
  %2127 = vrot.lane.b32.xlu0 %v830, 64
  %v2128 = vpop.permute.xlu0 %2127
  %2129 = vrot.lane.b32.xlu0 %v651, 64
  %v2130 = vpop.permute.xlu0 %2129
  %2131 = vrot.lane.b32.xlu0 %v831, 64
  %v2132 = vpop.permute.xlu0 %2131
  %2133 = vrot.lane.b32.xlu0 %v654, 64
  %v2134 = vpop.permute.xlu0 %2133
  %2135 = vrot.lane.b32.xlu0 %v832, 64
  %v2136 = vpop.permute.xlu0 %2135
  %2137 = vrot.lane.b32.xlu0 %v657, 64
  %v2138 = vpop.permute.xlu0 %2137
  %2139 = vrot.lane.b32.xlu0 %v833, 64
  %v2140 = vpop.permute.xlu0 %2139
  %2141 = vrot.lane.b32.xlu0 %v660, 64
  %v2142 = vpop.permute.xlu0 %2141
  %2143 = vrot.lane.b32.xlu0 %v834, 64
  %v2144 = vpop.permute.xlu0 %2143
  %2145 = vrot.lane.b32.xlu0 %v663, 64
  %v2146 = vpop.permute.xlu0 %2145
  %2147 = vrot.lane.b32.xlu0 %v835, 64
  %v2148 = vpop.permute.xlu0 %2147
  %2149 = vrot.lane.b32.xlu0 %v666, 64
  %v2150 = vpop.permute.xlu0 %2149
  %2151 = vrot.lane.b32.xlu0 %v836, 64
  %v2152 = vpop.permute.xlu0 %2151
  %2153 = vrot.lane.b32.xlu0 %v669, 64
  %v2154 = vpop.permute.xlu0 %2153
  %2155 = vrot.lane.b32.xlu0 %v837, 64
  %v2156 = vpop.permute.xlu0 %2155
  %2157 = vrot.lane.b32.xlu0 %v672, 64
  %v2158 = vpop.permute.xlu0 %2157
  %2159 = vrot.lane.b32.xlu0 %v838, 64
  %v2160 = vpop.permute.xlu0 %2159
  %2161 = vrot.lane.b32.xlu0 %v675, 64
  %v2162 = vpop.permute.xlu0 %2161
  %2163 = vrot.lane.b32.xlu0 %v839, 64
  %v2164 = vpop.permute.xlu0 %2163
  %2165 = vrot.lane.b32.xlu0 %v678, 64
  %v2166 = vpop.permute.xlu0 %2165
  %2167 = vrot.lane.b32.xlu0 %v823, 64
  %v2168 = vpop.permute.xlu0 %2167
  %2169 = vrot.lane.b32.xlu0 %v630, 64
  %v2170 = vpop.permute.xlu0 %2169
  %2171 = vrot.lane.b32.xlu0 %v841, 64
  %v2172 = vpop.permute.xlu0 %2171
  %2173 = vrot.lane.b32.xlu0 %v684, 64
  %v2174 = vpop.permute.xlu0 %2173
  %2175 = vrot.lane.b32.xlu0 %v842, 64
  %v2176 = vpop.permute.xlu0 %2175
  %2177 = vrot.lane.b32.xlu0 %v687, 64
  %v2178 = vpop.permute.xlu0 %2177
  %2179 = vrot.lane.b32.xlu0 %v843, 64
  %v2180 = vpop.permute.xlu0 %2179
  %2181 = vrot.lane.b32.xlu0 %v690, 64
  %v2182 = vpop.permute.xlu0 %2181
  %2183 = vrot.lane.b32.xlu0 %v844, 64
  %v2184 = vpop.permute.xlu0 %2183
  %2185 = vrot.lane.b32.xlu0 %v693, 64
  %v2186 = vpop.permute.xlu0 %2185
  %2187 = vrot.lane.b32.xlu0 %v845, 64
  %v2188 = vpop.permute.xlu0 %2187
  %2189 = vrot.lane.b32.xlu0 %v696, 64
  %v2190 = vpop.permute.xlu0 %2189
  %2191 = vrot.lane.b32.xlu0 %v846, 64
  %v2192 = vpop.permute.xlu0 %2191
  %2193 = vrot.lane.b32.xlu0 %v699, 64
  %v2194 = vpop.permute.xlu0 %2193
  %2195 = vrot.lane.b32.xlu0 %v847, 64
  %v2196 = vpop.permute.xlu0 %2195
  %2197 = vrot.lane.b32.xlu0 %v702, 64
  %v2198 = vpop.permute.xlu0 %2197
  %2199 = vrot.lane.b32.xlu0 %v848, 64
  %v2200 = vpop.permute.xlu0 %2199
  %2201 = vrot.lane.b32.xlu0 %v705, 64
  %v2202 = vpop.permute.xlu0 %2201
  %2203 = vrot.lane.b32.xlu0 %v849, 64
  %v2204 = vpop.permute.xlu0 %2203
  %2205 = vrot.lane.b32.xlu0 %v708, 64
  %v2206 = vpop.permute.xlu0 %2205
  %2207 = vrot.lane.b32.xlu0 %v850, 64
  %v2208 = vpop.permute.xlu0 %2207
  %2209 = vrot.lane.b32.xlu0 %v711, 64
  %v2210 = vpop.permute.xlu0 %2209
  %2211 = vrot.lane.b32.xlu0 %v851, 64
  %v2212 = vpop.permute.xlu0 %2211
  %2213 = vrot.lane.b32.xlu0 %v714, 64
  %v2214 = vpop.permute.xlu0 %2213
  %2215 = vrot.lane.b32.xlu0 %v852, 64
  %v2216 = vpop.permute.xlu0 %2215
  %2217 = vrot.lane.b32.xlu0 %v717, 64
  %v2218 = vpop.permute.xlu0 %2217
  %2219 = vrot.lane.b32.xlu0 %v853, 64
  %v2220 = vpop.permute.xlu0 %2219
  %2221 = vrot.lane.b32.xlu0 %v720, 64
  %v2222 = vpop.permute.xlu0 %2221
  %2223 = vrot.lane.b32.xlu0 %v854, 64
  %v2224 = vpop.permute.xlu0 %2223
  %2225 = vrot.lane.b32.xlu0 %v723, 64
  %v2226 = vpop.permute.xlu0 %2225
  %2227 = vrot.lane.b32.xlu0 %v855, 64
  %v2228 = vpop.permute.xlu0 %2227
  %2229 = vrot.lane.b32.xlu0 %v726, 64
  %v2230 = vpop.permute.xlu0 %2229
  %2293 = vrot.lane.b32.xlu0 %v964, 96
  %v2294 = vpop.permute.xlu0 %2293
  %2295 = vrot.lane.b32.xlu0 %v966, 96
  %v2296 = vpop.permute.xlu0 %2295
  %2297 = vrot.lane.b32.xlu0 %v969, 96
  %v2298 = vpop.permute.xlu0 %2297
  %2299 = vrot.lane.b32.xlu0 %v971, 96
  %v2300 = vpop.permute.xlu0 %2299
  %2301 = vrot.lane.b32.xlu0 %v974, 96
  %v2302 = vpop.permute.xlu0 %2301
  %2303 = vrot.lane.b32.xlu0 %v976, 96
  %v2304 = vpop.permute.xlu0 %2303
  %2305 = vrot.lane.b32.xlu0 %v979, 96
  %v2306 = vpop.permute.xlu0 %2305
  %2307 = vrot.lane.b32.xlu0 %v981, 96
  %v2308 = vpop.permute.xlu0 %2307
  %2309 = vrot.lane.b32.xlu0 %v984, 96
  %v2310 = vpop.permute.xlu0 %2309
  %2311 = vrot.lane.b32.xlu0 %v986, 96
  %v2312 = vpop.permute.xlu0 %2311
  %2313 = vrot.lane.b32.xlu0 %v989, 96
  %v2314 = vpop.permute.xlu0 %2313
  %2315 = vrot.lane.b32.xlu0 %v991, 96
  %v2316 = vpop.permute.xlu0 %2315
  %2317 = vrot.lane.b32.xlu0 %v994, 96
  %v2318 = vpop.permute.xlu0 %2317
  %2319 = vrot.lane.b32.xlu0 %v996, 96
  %v2320 = vpop.permute.xlu0 %2319
  %2321 = vrot.lane.b32.xlu0 %v999, 96
  %v2322 = vpop.permute.xlu0 %2321
  %2323 = vrot.lane.b32.xlu0 %v1001, 96
  %v2324 = vpop.permute.xlu0 %2323
  %2325 = vrot.lane.b32.xlu0 %v1004, 96
  %v2326 = vpop.permute.xlu0 %2325
  %2327 = vrot.lane.b32.xlu0 %v1006, 96
  %v2328 = vpop.permute.xlu0 %2327
  %2329 = vrot.lane.b32.xlu0 %v1009, 96
  %v2330 = vpop.permute.xlu0 %2329
  %2331 = vrot.lane.b32.xlu0 %v1011, 96
  %v2332 = vpop.permute.xlu0 %2331
  %2333 = vrot.lane.b32.xlu0 %v1014, 96
  %v2334 = vpop.permute.xlu0 %2333
  %2335 = vrot.lane.b32.xlu0 %v1016, 96
  %v2336 = vpop.permute.xlu0 %2335
  %2337 = vrot.lane.b32.xlu0 %v1019, 96
  %v2338 = vpop.permute.xlu0 %2337
  %2339 = vrot.lane.b32.xlu0 %v1021, 96
  %v2340 = vpop.permute.xlu0 %2339
  %2341 = vrot.lane.b32.xlu0 %v1024, 96
  %v2342 = vpop.permute.xlu0 %2341
  %2343 = vrot.lane.b32.xlu0 %v1026, 96
  %v2344 = vpop.permute.xlu0 %2343
  %2345 = vrot.lane.b32.xlu0 %v1029, 96
  %v2346 = vpop.permute.xlu0 %2345
  %2347 = vrot.lane.b32.xlu0 %v1031, 96
  %v2348 = vpop.permute.xlu0 %2347
  %2349 = vrot.lane.b32.xlu0 %v1833, 96
  %v2350 = vpop.permute.xlu0 %2349
  %2351 = vrot.lane.b32.xlu0 %v1835, 96
  %v2352 = vpop.permute.xlu0 %2351
  %2353 = vrot.lane.b32.xlu0 %v954, 96
  %v2354 = vpop.permute.xlu0 %2353
  %2355 = vrot.lane.b32.xlu0 %v956, 96
  %v2356 = vpop.permute.xlu0 %2355
  %2357 = vrot.lane.b32.xlu0 %v1039, 96
  %v2358 = vpop.permute.xlu0 %2357
  %2359 = vrot.lane.b32.xlu0 %v1041, 96
  %v2360 = vpop.permute.xlu0 %2359
  %2361 = vrot.lane.b32.xlu0 %v1044, 96
  %v2362 = vpop.permute.xlu0 %2361
  %2363 = vrot.lane.b32.xlu0 %v1046, 96
  %v2364 = vpop.permute.xlu0 %2363
  %2365 = vrot.lane.b32.xlu0 %v1049, 96
  %v2366 = vpop.permute.xlu0 %2365
  %2367 = vrot.lane.b32.xlu0 %v1051, 96
  %v2368 = vpop.permute.xlu0 %2367
  %2369 = vrot.lane.b32.xlu0 %v1054, 96
  %v2370 = vpop.permute.xlu0 %2369
  %2371 = vrot.lane.b32.xlu0 %v1056, 96
  %v2372 = vpop.permute.xlu0 %2371
  %2373 = vrot.lane.b32.xlu0 %v1059, 96
  %v2374 = vpop.permute.xlu0 %2373
  %2375 = vrot.lane.b32.xlu0 %v1061, 96
  %v2376 = vpop.permute.xlu0 %2375
  %2377 = vrot.lane.b32.xlu0 %v1064, 96
  %v2378 = vpop.permute.xlu0 %2377
  %2379 = vrot.lane.b32.xlu0 %v1066, 96
  %v2380 = vpop.permute.xlu0 %2379
  %2381 = vrot.lane.b32.xlu0 %v1069, 96
  %v2382 = vpop.permute.xlu0 %2381
  %2383 = vrot.lane.b32.xlu0 %v1071, 96
  %v2384 = vpop.permute.xlu0 %2383
  %2385 = vrot.lane.b32.xlu0 %v1074, 96
  %v2386 = vpop.permute.xlu0 %2385
  %2387 = vrot.lane.b32.xlu0 %v1076, 96
  %v2388 = vpop.permute.xlu0 %2387
  %2389 = vrot.lane.b32.xlu0 %v1079, 96
  %v2390 = vpop.permute.xlu0 %2389
  %2391 = vrot.lane.b32.xlu0 %v1081, 96
  %v2392 = vpop.permute.xlu0 %2391
  %2393 = vrot.lane.b32.xlu0 %v1084, 96
  %v2394 = vpop.permute.xlu0 %2393
  %2395 = vrot.lane.b32.xlu0 %v1086, 96
  %v2396 = vpop.permute.xlu0 %2395
  %2397 = vrot.lane.b32.xlu0 %v1089, 96
  %v2398 = vpop.permute.xlu0 %2397
  %2399 = vrot.lane.b32.xlu0 %v1091, 96
  %v2400 = vpop.permute.xlu0 %2399
  %2401 = vrot.lane.b32.xlu0 %v1094, 96
  %v2402 = vpop.permute.xlu0 %2401
  %2403 = vrot.lane.b32.xlu0 %v1096, 96
  %v2404 = vpop.permute.xlu0 %2403
  %2405 = vrot.lane.b32.xlu0 %v1099, 96
  %v2406 = vpop.permute.xlu0 %2405
  %2407 = vrot.lane.b32.xlu0 %v1101, 96
  %v2408 = vpop.permute.xlu0 %2407
  %2409 = vrot.lane.b32.xlu0 %v1104, 96
  %v2410 = vpop.permute.xlu0 %2409
  %2411 = vrot.lane.b32.xlu0 %v1106, 96
  %v2412 = vpop.permute.xlu0 %2411
  %2413 = vrot.lane.b32.xlu0 %v1838, 96
  %v2414 = vpop.permute.xlu0 %2413
  %2415 = vrot.lane.b32.xlu0 %v1840, 96
  %v2416 = vpop.permute.xlu0 %2415
  %vm2479 = vcmask 261120
  %v2480 = vsel %vm2479, %v823, %v1108
  %v2481 = vsel %vm2479, %v630, %v1110
  %v2482 = vsel %vm2479, %v824, %v1112
  %v2483 = vsel %vm2479, %v633, %v1114
  %v2484 = vsel %vm2479, %v825, %v1116
  %v2485 = vsel %vm2479, %v636, %v1118
  %v2486 = vsel %vm2479, %v826, %v1120
  %v2487 = vsel %vm2479, %v639, %v1122
  %v2488 = vsel %vm2479, %v827, %v1124
  %v2489 = vsel %vm2479, %v642, %v1126
  %v2490 = vsel %vm2479, %v828, %v1128
  %v2491 = vsel %vm2479, %v645, %v1130
  %v2492 = vsel %vm2479, %v829, %v1132
  %v2493 = vsel %vm2479, %v648, %v1134
  %v2494 = vsel %vm2479, %v830, %v1136
  %v2495 = vsel %vm2479, %v651, %v1138
  %v2496 = vsel %vm2479, %v831, %v1140
  %v2497 = vsel %vm2479, %v654, %v1142
  %v2498 = vsel %vm2479, %v832, %v1144
  %v2499 = vsel %vm2479, %v657, %v1146
  %v2500 = vsel %vm2479, %v833, %v1148
  %v2501 = vsel %vm2479, %v660, %v1150
  %v2502 = vsel %vm2479, %v834, %v1152
  %v2503 = vsel %vm2479, %v663, %v1154
  %v2504 = vsel %vm2479, %v835, %v1156
  %v2505 = vsel %vm2479, %v666, %v1158
  %v2506 = vsel %vm2479, %v836, %v1160
  %v2507 = vsel %vm2479, %v669, %v1162
  %v2508 = vsel %vm2479, %v837, %v1164
  %v2509 = vsel %vm2479, %v672, %v1166
  %v2510 = vsel %vm2479, %v838, %v1168
  %v2511 = vsel %vm2479, %v675, %v1170
  %v2512 = vsel %vm2479, %v840, %v1172
  %v2513 = vsel %vm2479, %v681, %v1174
  %v2514 = vsel %vm2479, %v841, %v1176
  %v2515 = vsel %vm2479, %v684, %v1178
  %v2516 = vsel %vm2479, %v842, %v1180
  %v2517 = vsel %vm2479, %v687, %v1182
  %v2518 = vsel %vm2479, %v843, %v1184
  %v2519 = vsel %vm2479, %v690, %v1186
  %v2520 = vsel %vm2479, %v844, %v1188
  %v2521 = vsel %vm2479, %v693, %v1190
  %v2522 = vsel %vm2479, %v845, %v1192
  %v2523 = vsel %vm2479, %v696, %v1194
  %v2524 = vsel %vm2479, %v846, %v1196
  %v2525 = vsel %vm2479, %v699, %v1198
  %v2526 = vsel %vm2479, %v847, %v1200
  %v2527 = vsel %vm2479, %v702, %v1202
  %v2528 = vsel %vm2479, %v848, %v1204
  %v2529 = vsel %vm2479, %v705, %v1206
  %v2530 = vsel %vm2479, %v849, %v1208
  %v2531 = vsel %vm2479, %v708, %v1210
  %v2532 = vsel %vm2479, %v850, %v1212
  %v2533 = vsel %vm2479, %v711, %v1214
  %v2534 = vsel %vm2479, %v851, %v1216
  %v2535 = vsel %vm2479, %v714, %v1218
  %v2536 = vsel %vm2479, %v852, %v1220
  %v2537 = vsel %vm2479, %v717, %v1222
  %v2538 = vsel %vm2479, %v853, %v1224
  %v2539 = vsel %vm2479, %v720, %v1226
  %v2540 = vsel %vm2479, %v854, %v1228
  %v2541 = vsel %vm2479, %v723, %v1230
  %vm2542 = vcmask 523264
  %v2543 = vsel %vm2542, %v2480, %v1450
  %v2544 = vsel %vm2542, %v2481, %v1452
  %v2545 = vsel %vm2542, %v2482, %v1454
  %v2546 = vsel %vm2542, %v2483, %v1456
  %v2547 = vsel %vm2542, %v2484, %v1458
  %v2548 = vsel %vm2542, %v2485, %v1460
  %v2549 = vsel %vm2542, %v2486, %v1462
  %v2550 = vsel %vm2542, %v2487, %v1464
  %v2551 = vsel %vm2542, %v2488, %v1466
  %v2552 = vsel %vm2542, %v2489, %v1468
  %v2553 = vsel %vm2542, %v2490, %v1470
  %v2554 = vsel %vm2542, %v2491, %v1472
  %v2555 = vsel %vm2542, %v2492, %v1474
  %v2556 = vsel %vm2542, %v2493, %v1476
  %v2557 = vsel %vm2542, %v2494, %v1478
  %v2558 = vsel %vm2542, %v2495, %v1480
  %v2559 = vsel %vm2542, %v2496, %v1482
  %v2560 = vsel %vm2542, %v2497, %v1484
  %v2561 = vsel %vm2542, %v2498, %v1486
  %v2562 = vsel %vm2542, %v2499, %v1488
  %v2563 = vsel %vm2542, %v2500, %v1490
  %v2564 = vsel %vm2542, %v2501, %v1492
  %v2565 = vsel %vm2542, %v2502, %v1494
  %v2566 = vsel %vm2542, %v2503, %v1496
  %v2567 = vsel %vm2542, %v2504, %v1498
  %v2568 = vsel %vm2542, %v2505, %v1500
  %v2569 = vsel %vm2542, %v2506, %v1502
  %v2570 = vsel %vm2542, %v2507, %v1504
  %v2571 = vsel %vm2542, %v2508, %v1506
  %v2572 = vsel %vm2542, %v2509, %v1508
  %v2573 = vsel %vm2542, %v2510, %v1510
  %v2574 = vsel %vm2542, %v2511, %v1512
  %v2575 = vsel %vm2542, %v2512, %v1514
  %v2576 = vsel %vm2542, %v2513, %v1516
  %v2577 = vsel %vm2542, %v2514, %v1518
  %v2578 = vsel %vm2542, %v2515, %v1520
  %v2579 = vsel %vm2542, %v2516, %v1522
  %v2580 = vsel %vm2542, %v2517, %v1524
  %v2581 = vsel %vm2542, %v2518, %v1526
  %v2582 = vsel %vm2542, %v2519, %v1528
  %v2583 = vsel %vm2542, %v2520, %v1530
  %v2584 = vsel %vm2542, %v2521, %v1532
  %v2585 = vsel %vm2542, %v2522, %v1534
  %v2586 = vsel %vm2542, %v2523, %v1536
  %v2587 = vsel %vm2542, %v2524, %v1538
  %v2588 = vsel %vm2542, %v2525, %v1540
  %v2589 = vsel %vm2542, %v2526, %v1542
  %v2590 = vsel %vm2542, %v2527, %v1544
  %v2591 = vsel %vm2542, %v2528, %v1546
  %v2592 = vsel %vm2542, %v2529, %v1548
  %v2593 = vsel %vm2542, %v2530, %v1550
  %v2594 = vsel %vm2542, %v2531, %v1552
  %v2595 = vsel %vm2542, %v2532, %v1554
  %v2596 = vsel %vm2542, %v2533, %v1556
  %v2597 = vsel %vm2542, %v2534, %v1558
  %v2598 = vsel %vm2542, %v2535, %v1560
  %v2599 = vsel %vm2542, %v2536, %v1562
  %v2600 = vsel %vm2542, %v2537, %v1564
  %v2601 = vsel %vm2542, %v2538, %v1566
  %v2602 = vsel %vm2542, %v2539, %v1568
  %v2603 = vsel %vm2542, %v2540, %v1570
  %v2604 = vsel %vm2542, %v2541, %v1572
  %vm2605 = vcmask 785408
  %v2606 = vsel %vm2605, %v2543, %v1638
  %v2607 = vsel %vm2605, %v2544, %v1640
  %v2608 = vsel %vm2605, %v2545, %v1642
  %v2609 = vsel %vm2605, %v2546, %v1644
  %v2610 = vsel %vm2605, %v2547, %v1646
  %v2611 = vsel %vm2605, %v2548, %v1648
  %v2612 = vsel %vm2605, %v2549, %v1650
  %v2613 = vsel %vm2605, %v2550, %v1652
  %v2614 = vsel %vm2605, %v2551, %v1654
  %v2615 = vsel %vm2605, %v2552, %v1656
  %v2616 = vsel %vm2605, %v2553, %v1658
  %v2617 = vsel %vm2605, %v2554, %v1660
  %v2618 = vsel %vm2605, %v2555, %v1662
  %v2619 = vsel %vm2605, %v2556, %v1664
  %v2620 = vsel %vm2605, %v2557, %v1666
  %v2621 = vsel %vm2605, %v2558, %v1668
  %v2622 = vsel %vm2605, %v2559, %v1670
  %v2623 = vsel %vm2605, %v2560, %v1672
  %v2624 = vsel %vm2605, %v2561, %v1674
  %v2625 = vsel %vm2605, %v2562, %v1676
  %v2626 = vsel %vm2605, %v2563, %v1678
  %v2627 = vsel %vm2605, %v2564, %v1680
  %v2628 = vsel %vm2605, %v2565, %v1682
  %v2629 = vsel %vm2605, %v2566, %v1684
  %v2630 = vsel %vm2605, %v2567, %v1686
  %v2631 = vsel %vm2605, %v2568, %v1688
  %v2632 = vsel %vm2605, %v2569, %v1690
  %v2633 = vsel %vm2605, %v2570, %v1692
  %v2634 = vsel %vm2605, %v2571, %v1694
  %v2635 = vsel %vm2605, %v2572, %v1696
  %v2636 = vsel %vm2605, %v2573, %v1698
  %v2637 = vsel %vm2605, %v2574, %v1700
  %v2638 = vsel %vm2605, %v2543, %v1702
  %v2639 = vsel %vm2605, %v2544, %v1704
  %v2640 = vsel %vm2605, %v2575, %v1706
  %v2641 = vsel %vm2605, %v2576, %v1708
  %v2642 = vsel %vm2605, %v2577, %v1710
  %v2643 = vsel %vm2605, %v2578, %v1712
  %v2644 = vsel %vm2605, %v2579, %v1714
  %v2645 = vsel %vm2605, %v2580, %v1716
  %v2646 = vsel %vm2605, %v2581, %v1718
  %v2647 = vsel %vm2605, %v2582, %v1720
  %v2648 = vsel %vm2605, %v2583, %v1722
  %v2649 = vsel %vm2605, %v2584, %v1724
  %v2650 = vsel %vm2605, %v2585, %v1726
  %v2651 = vsel %vm2605, %v2586, %v1728
  %v2652 = vsel %vm2605, %v2587, %v1730
  %v2653 = vsel %vm2605, %v2588, %v1732
  %v2654 = vsel %vm2605, %v2589, %v1734
  %v2655 = vsel %vm2605, %v2590, %v1736
  %v2656 = vsel %vm2605, %v2591, %v1738
  %v2657 = vsel %vm2605, %v2592, %v1740
  %v2658 = vsel %vm2605, %v2593, %v1742
  %v2659 = vsel %vm2605, %v2594, %v1744
  %v2660 = vsel %vm2605, %v2595, %v1746
  %v2661 = vsel %vm2605, %v2596, %v1748
  %v2662 = vsel %vm2605, %v2597, %v1750
  %v2663 = vsel %vm2605, %v2598, %v1752
  %v2664 = vsel %vm2605, %v2599, %v1754
  %v2665 = vsel %vm2605, %v2600, %v1756
  %v2666 = vsel %vm2605, %v2601, %v1758
  %v2667 = vsel %vm2605, %v2602, %v1760
  %v2668 = vsel %vm2605, %v2603, %v1762
  %v2669 = vsel %vm2605, %v2604, %v1764
  %v2670 = vsel %vm2479, %v959, %v1916
  %v2671 = vsel %vm2479, %v961, %v1918
  %v2672 = vsel %vm2479, %v964, %v1920
  %v2673 = vsel %vm2479, %v966, %v1922
  %v2674 = vsel %vm2479, %v969, %v1924
  %v2675 = vsel %vm2479, %v971, %v1926
  %v2676 = vsel %vm2479, %v974, %v1928
  %v2677 = vsel %vm2479, %v976, %v1930
  %v2678 = vsel %vm2479, %v979, %v1932
  %v2679 = vsel %vm2479, %v981, %v1934
  %v2680 = vsel %vm2479, %v984, %v1936
  %v2681 = vsel %vm2479, %v986, %v1938
  %v2682 = vsel %vm2479, %v989, %v1940
  %v2683 = vsel %vm2479, %v991, %v1942
  %v2684 = vsel %vm2479, %v994, %v1944
  %v2685 = vsel %vm2479, %v996, %v1946
  %v2686 = vsel %vm2479, %v999, %v1948
  %v2687 = vsel %vm2479, %v1001, %v1950
  %v2688 = vsel %vm2479, %v1004, %v1952
  %v2689 = vsel %vm2479, %v1006, %v1954
  %v2690 = vsel %vm2479, %v1009, %v1956
  %v2691 = vsel %vm2479, %v1011, %v1958
  %v2692 = vsel %vm2479, %v1014, %v1960
  %v2693 = vsel %vm2479, %v1016, %v1962
  %v2694 = vsel %vm2479, %v1019, %v1964
  %v2695 = vsel %vm2479, %v1021, %v1966
  %v2696 = vsel %vm2479, %v1024, %v1968
  %v2697 = vsel %vm2479, %v1026, %v1970
  %v2698 = vsel %vm2479, %v1029, %v1972
  %v2699 = vsel %vm2479, %v1031, %v1974
  %v2700 = vsel %vm2479, %v1833, %v1976
  %v2701 = vsel %vm2479, %v1835, %v1978
  %v2702 = vsel %vm2479, %v1034, %v1980
  %v2703 = vsel %vm2479, %v1036, %v1982
  %v2704 = vsel %vm2479, %v1039, %v1984
  %v2705 = vsel %vm2479, %v1041, %v1986
  %v2706 = vsel %vm2479, %v1044, %v1988
  %v2707 = vsel %vm2479, %v1046, %v1990
  %v2708 = vsel %vm2479, %v1049, %v1992
  %v2709 = vsel %vm2479, %v1051, %v1994
  %v2710 = vsel %vm2479, %v1054, %v1996
  %v2711 = vsel %vm2479, %v1056, %v1998
  %v2712 = vsel %vm2479, %v1059, %v2000
  %v2713 = vsel %vm2479, %v1061, %v2002
  %v2714 = vsel %vm2479, %v1064, %v2004
  %v2715 = vsel %vm2479, %v1066, %v2006
  %v2716 = vsel %vm2479, %v1069, %v2008
  %v2717 = vsel %vm2479, %v1071, %v2010
  %v2718 = vsel %vm2479, %v1074, %v2012
  %v2719 = vsel %vm2479, %v1076, %v2014
  %v2720 = vsel %vm2479, %v1079, %v2016
  %v2721 = vsel %vm2479, %v1081, %v2018
  %v2722 = vsel %vm2479, %v1084, %v2020
  %v2723 = vsel %vm2479, %v1086, %v2022
  %v2724 = vsel %vm2479, %v1089, %v2024
  %v2725 = vsel %vm2479, %v1091, %v2026
  %v2726 = vsel %vm2479, %v1094, %v2028
  %v2727 = vsel %vm2479, %v1096, %v2030
  %v2728 = vsel %vm2479, %v1099, %v2032
  %v2729 = vsel %vm2479, %v1101, %v2034
  %v2730 = vsel %vm2479, %v1104, %v2036
  %v2731 = vsel %vm2479, %v1106, %v2038
  %v2732 = vsel %vm2479, %v1838, %v2040
  %v2733 = vsel %vm2479, %v1840, %v2042
  %v2734 = vsel %vm2542, %v2670, %v2108
  %v2735 = vsel %vm2542, %v2671, %v2110
  %v2736 = vsel %vm2542, %v2672, %v2112
  %v2737 = vsel %vm2542, %v2673, %v2114
  %v2738 = vsel %vm2542, %v2674, %v2116
  %v2739 = vsel %vm2542, %v2675, %v2118
  %v2740 = vsel %vm2542, %v2676, %v2120
  %v2741 = vsel %vm2542, %v2677, %v2122
  %v2742 = vsel %vm2542, %v2678, %v2124
  %v2743 = vsel %vm2542, %v2679, %v2126
  %v2744 = vsel %vm2542, %v2680, %v2128
  %v2745 = vsel %vm2542, %v2681, %v2130
  %v2746 = vsel %vm2542, %v2682, %v2132
  %v2747 = vsel %vm2542, %v2683, %v2134
  %v2748 = vsel %vm2542, %v2684, %v2136
  %v2749 = vsel %vm2542, %v2685, %v2138
  %v2750 = vsel %vm2542, %v2686, %v2140
  %v2751 = vsel %vm2542, %v2687, %v2142
  %v2752 = vsel %vm2542, %v2688, %v2144
  %v2753 = vsel %vm2542, %v2689, %v2146
  %v2754 = vsel %vm2542, %v2690, %v2148
  %v2755 = vsel %vm2542, %v2691, %v2150
  %v2756 = vsel %vm2542, %v2692, %v2152
  %v2757 = vsel %vm2542, %v2693, %v2154
  %v2758 = vsel %vm2542, %v2694, %v2156
  %v2759 = vsel %vm2542, %v2695, %v2158
  %v2760 = vsel %vm2542, %v2696, %v2160
  %v2761 = vsel %vm2542, %v2697, %v2162
  %v2762 = vsel %vm2542, %v2698, %v2164
  %v2763 = vsel %vm2542, %v2699, %v2166
  %v2764 = vsel %vm2542, %v2700, %v2168
  %v2765 = vsel %vm2542, %v2701, %v2170
  %v2766 = vsel %vm2542, %v2702, %v2172
  %v2767 = vsel %vm2542, %v2703, %v2174
  %v2768 = vsel %vm2542, %v2704, %v2176
  %v2769 = vsel %vm2542, %v2705, %v2178
  %v2770 = vsel %vm2542, %v2706, %v2180
  %v2771 = vsel %vm2542, %v2707, %v2182
  %v2772 = vsel %vm2542, %v2708, %v2184
  %v2773 = vsel %vm2542, %v2709, %v2186
  %v2774 = vsel %vm2542, %v2710, %v2188
  %v2775 = vsel %vm2542, %v2711, %v2190
  %v2776 = vsel %vm2542, %v2712, %v2192
  %v2777 = vsel %vm2542, %v2713, %v2194
  %v2778 = vsel %vm2542, %v2714, %v2196
  %v2779 = vsel %vm2542, %v2715, %v2198
  %v2780 = vsel %vm2542, %v2716, %v2200
  %v2781 = vsel %vm2542, %v2717, %v2202
  %v2782 = vsel %vm2542, %v2718, %v2204
  %v2783 = vsel %vm2542, %v2719, %v2206
  %v2784 = vsel %vm2542, %v2720, %v2208
  %v2785 = vsel %vm2542, %v2721, %v2210
  %v2786 = vsel %vm2542, %v2722, %v2212
  %v2787 = vsel %vm2542, %v2723, %v2214
  %v2788 = vsel %vm2542, %v2724, %v2216
  %v2789 = vsel %vm2542, %v2725, %v2218
  %v2790 = vsel %vm2542, %v2726, %v2220
  %v2791 = vsel %vm2542, %v2727, %v2222
  %v2792 = vsel %vm2542, %v2728, %v2224
  %v2793 = vsel %vm2542, %v2729, %v2226
  %v2794 = vsel %vm2542, %v2730, %v2228
  %v2795 = vsel %vm2542, %v2731, %v2230
  %v2796 = vsel %vm2542, %v2732, %v2168
  %v2797 = vsel %vm2542, %v2733, %v2170
  %v2798 = vsel %vm2605, %v2734, %v2294
  %v2799 = vsel %vm2605, %v2735, %v2296
  %v2800 = vsel %vm2605, %v2736, %v2298
  %v2801 = vsel %vm2605, %v2737, %v2300
  %v2802 = vsel %vm2605, %v2738, %v2302
  %v2803 = vsel %vm2605, %v2739, %v2304
  %v2804 = vsel %vm2605, %v2740, %v2306
  %v2805 = vsel %vm2605, %v2741, %v2308
  %v2806 = vsel %vm2605, %v2742, %v2310
  %v2807 = vsel %vm2605, %v2743, %v2312
  %v2808 = vsel %vm2605, %v2744, %v2314
  %v2809 = vsel %vm2605, %v2745, %v2316
  %v2810 = vsel %vm2605, %v2746, %v2318
  %v2811 = vsel %vm2605, %v2747, %v2320
  %v2812 = vsel %vm2605, %v2748, %v2322
  %v2813 = vsel %vm2605, %v2749, %v2324
  %v2814 = vsel %vm2605, %v2750, %v2326
  %v2815 = vsel %vm2605, %v2751, %v2328
  %v2816 = vsel %vm2605, %v2752, %v2330
  %v2817 = vsel %vm2605, %v2753, %v2332
  %v2818 = vsel %vm2605, %v2754, %v2334
  %v2819 = vsel %vm2605, %v2755, %v2336
  %v2820 = vsel %vm2605, %v2756, %v2338
  %v2821 = vsel %vm2605, %v2757, %v2340
  %v2822 = vsel %vm2605, %v2758, %v2342
  %v2823 = vsel %vm2605, %v2759, %v2344
  %v2824 = vsel %vm2605, %v2760, %v2346
  %v2825 = vsel %vm2605, %v2761, %v2348
  %v2826 = vsel %vm2605, %v2762, %v2350
  %v2827 = vsel %vm2605, %v2763, %v2352
  %v2828 = vsel %vm2605, %v2764, %v2354
  %v2829 = vsel %vm2605, %v2765, %v2356
  %v2830 = vsel %vm2605, %v2766, %v2358
  %v2831 = vsel %vm2605, %v2767, %v2360
  %v2832 = vsel %vm2605, %v2768, %v2362
  %v2833 = vsel %vm2605, %v2769, %v2364
  %v2834 = vsel %vm2605, %v2770, %v2366
  %v2835 = vsel %vm2605, %v2771, %v2368
  %v2836 = vsel %vm2605, %v2772, %v2370
  %v2837 = vsel %vm2605, %v2773, %v2372
  %v2838 = vsel %vm2605, %v2774, %v2374
  %v2839 = vsel %vm2605, %v2775, %v2376
  %v2840 = vsel %vm2605, %v2776, %v2378
  %v2841 = vsel %vm2605, %v2777, %v2380
  %v2842 = vsel %vm2605, %v2778, %v2382
  %v2843 = vsel %vm2605, %v2779, %v2384
  %v2844 = vsel %vm2605, %v2780, %v2386
  %v2845 = vsel %vm2605, %v2781, %v2388
  %v2846 = vsel %vm2605, %v2782, %v2390
  %v2847 = vsel %vm2605, %v2783, %v2392
  %v2848 = vsel %vm2605, %v2784, %v2394
  %v2849 = vsel %vm2605, %v2785, %v2396
  %v2850 = vsel %vm2605, %v2786, %v2398
  %v2851 = vsel %vm2605, %v2787, %v2400
  %v2852 = vsel %vm2605, %v2788, %v2402
  %v2853 = vsel %vm2605, %v2789, %v2404
  %v2854 = vsel %vm2605, %v2790, %v2406
  %v2855 = vsel %vm2605, %v2791, %v2408
  %v2856 = vsel %vm2605, %v2792, %v2410
  %v2857 = vsel %vm2605, %v2793, %v2412
  %v2858 = vsel %vm2605, %v2794, %v2414
  %v2859 = vsel %vm2605, %v2795, %v2416
  %v2860 = vsel %vm2605, %v2796, %v2354
  %v2861 = vsel %vm2605, %v2797, %v2356
  %v2862 = vld [vmem:[%s3] sm:$0xff]
  %v2863 = vld [vmem:[%s3 + $0x8] sm:$0xff]
  %v2864 = vld [vmem:[%s3 + $0x10] sm:$0xff]
  %v2865 = vld [vmem:[%s3 + $0x18] sm:$0xff]
  %v2866 = vld [vmem:[%s3 + $0x20] sm:$0xff]
  %v2867 = vld [vmem:[%s3 + $0x28] sm:$0xff]
  %v2868 = vld [vmem:[%s3 + $0x30] sm:$0xff]
  %v2869 = vld [vmem:[%s3 + $0x38] sm:$0xff]
  %v2870 = vld [vmem:[%s3 + $0x40] sm:$0xff]
  %v2871 = vld [vmem:[%s3 + $0x48] sm:$0xff]
  %v2872 = vld [vmem:[%s3 + $0x50] sm:$0xff]
  %v2873 = vld [vmem:[%s3 + $0x58] sm:$0xff]
  %v2874 = vld [vmem:[%s3 + $0x60] sm:$0xff]
  %v2875 = vld [vmem:[%s3 + $0x68] sm:$0xff]
  %v2876 = vld [vmem:[%s3 + $0x70] sm:$0xff]
  %v2877 = vld [vmem:[%s3 + $0x78] sm:$0xff]
  %v2878 = vld [vmem:[%s3 + $0x80] sm:$0xff]
  %v2879 = vld [vmem:[%s3 + $0x88] sm:$0xff]
  %v2880 = vld [vmem:[%s3 + $0x90] sm:$0xff]
  %v2881 = vld [vmem:[%s3 + $0x98] sm:$0xff]
  %v2882 = vld [vmem:[%s3 + $0xa0] sm:$0xff]
  %v2883 = vld [vmem:[%s3 + $0xa8] sm:$0xff]
  %v2884 = vld [vmem:[%s3 + $0xb0] sm:$0xff]
  %v2885 = vld [vmem:[%s3 + $0xb8] sm:$0xff]
  %v2886 = vld [vmem:[%s3 + $0xc0] sm:$0xff]
  %v2887 = vld [vmem:[%s3 + $0xc8] sm:$0xff]
  %v2888 = vld [vmem:[%s3 + $0xd0] sm:$0xff]
  %v2889 = vld [vmem:[%s3 + $0xd8] sm:$0xff]
  %v2890 = vld [vmem:[%s3 + $0xe0] sm:$0xff]
  %v2891 = vld [vmem:[%s3 + $0xe8] sm:$0xff]
  %v2892 = vld [vmem:[%s3 + $0xf0] sm:$0xff]
  %v2893 = vld [vmem:[%s3 + $0xf8] sm:$0xff]
  %v2894 = vld [vmem:[%s3 + $0x100] sm:$0xff]
  %v2895 = vld [vmem:[%s3 + $0x108] sm:$0xff]
  %v2896 = vld [vmem:[%s3 + $0x110] sm:$0xff]
  %v2897 = vld [vmem:[%s3 + $0x118] sm:$0xff]
  %v2898 = vld [vmem:[%s4] sm:$0x1]
  %v2900 = vperm.slane %v2898, 0
  %v2902 = vsel %vm2479, %v1306, 0
  %v2904 = vsel %vm2479, %v1308, 0
  %v2906 = vsel %vm2479, %v1311, 0
  %v2908 = vsel %vm2479, %v1313, 0
  %v2910 = vsel %vm2479, %v1316, 0
  %v2912 = vsel %vm2479, %v1318, 0
  %v2914 = vsel %vm2479, %v1321, 0
  %v2916 = vsel %vm2479, %v1323, 0
  %v2918 = vsel %vm2479, %v1326, 0
  %v2920 = vsel %vm2479, %v1328, 0
  %v2922 = vsel %vm2479, %v1331, 0
  %v2924 = vsel %vm2479, %v1333, 0
  %v2926 = vsel %vm2479, %v1336, 0
  %v2928 = vsel %vm2479, %v1338, 0
  %v2930 = vsel %vm2479, %v1341, 0
  %v2932 = vsel %vm2479, %v1343, 0
  %v2934 = vsel %vm2479, %v1346, 0
  %v2936 = vsel %vm2479, %v1348, 0
  %v2938 = vsel %vm2479, %v1351, 0
  %v2940 = vsel %vm2479, %v1353, 0
  %v2942 = vsel %vm2479, %v1356, 0
  %v2944 = vsel %vm2479, %v1358, 0
  %v2946 = vsel %vm2479, %v1361, 0
  %v2948 = vsel %vm2479, %v1363, 0
  %v2950 = vsel %vm2479, %v1366, 0
  %v2952 = vsel %vm2479, %v1368, 0
  %v2954 = vsel %vm2479, %v1371, 0
  %v2956 = vsel %vm2479, %v1373, 0
  %v2958 = vsel %vm2479, %v1907, 0
  %v2960 = vsel %vm2479, %v1909, 0
  %v2962 = vsel %vm2479, %v1296, 0
  %v2964 = vsel %vm2479, %v1298, 0
  %v2966 = vsel %vm2479, %v1381, 0
  %v2968 = vsel %vm2479, %v1383, 0
  %v2970 = vsel %vm2479, %v1386, 0
  %v2972 = vsel %vm2479, %v1388, 0
  %v2974 = vsel %vm2479, %v1391, 0
  %v2976 = vsel %vm2479, %v1393, 0
  %v2978 = vsel %vm2479, %v1396, 0
  %v2980 = vsel %vm2479, %v1398, 0
  %v2982 = vsel %vm2479, %v1401, 0
  %v2984 = vsel %vm2479, %v1403, 0
  %v2986 = vsel %vm2479, %v1406, 0
  %v2988 = vsel %vm2479, %v1408, 0
  %v2990 = vsel %vm2479, %v1411, 0
  %v2992 = vsel %vm2479, %v1413, 0
  %v2994 = vsel %vm2479, %v1416, 0
  %v2996 = vsel %vm2479, %v1418, 0
  %v2998 = vsel %vm2479, %v1421, 0
  %v3000 = vsel %vm2479, %v1423, 0
  %v3002 = vsel %vm2479, %v1426, 0
  %v3004 = vsel %vm2479, %v1428, 0
  %v3006 = vsel %vm2479, %v1431, 0
  %v3008 = vsel %vm2479, %v1433, 0
  %v3010 = vsel %vm2479, %v1436, 0
  %v3012 = vsel %vm2479, %v1438, 0
  %v3014 = vsel %vm2479, %v1441, 0
  %v3016 = vsel %vm2479, %v1443, 0
  %v3018 = vsel %vm2479, %v1446, 0
  %v3020 = vsel %vm2479, %v1448, 0
  %v3022 = vsel %vm2479, %v1912, 0
  %v3024 = vsel %vm2479, %v1914, 0
  %3026 = vmatpush.msra.mxu0 %v2877
  %3027 = vmatpush.msra.mxu0 %v2876
  %3028 = vmatpush.msra.mxu0 %v2875
  %3029 = vmatpush.msra.mxu0 %v2874
  %3030 = vmatpush.msra.mxu0 %v2873
  %3031 = vmatpush.msra.mxu0 %v2872
  %3032 = vmatpush.msra.mxu0 %v2871
  %3033 = vmatpush.msra.mxu0 %v2870
  %3034 = vmatpush.msra.mxu0 %v2869
  %3035 = vmatpush.msra.mxu0 %v2868
  %3036 = vmatpush.msra.mxu0 %v2867
  %3037 = vmatpush.msra.mxu0 %v2866
  %3038 = vmatpush.msra.mxu0 %v2865
  %3039 = vmatpush.msra.mxu0 %v2864
  %3040 = vmatpush.msra.mxu0 %v2863
  %3041 = vmatpush.msra.mxu0 %v2862
  %3042 = vmatmul.f32.gmra.mxu0 %v2606
  %v3043 = vpop.f32.mrf.mxu0
  %v3044 = vadd.f32 %v2900, %v3043
  %3045 = vmatmul.f32.gmra.mxu0 %v2607
  %v3046 = vpop.f32.mrf.mxu0
  %v3047 = vadd.f32 %v2900, %v3046
  %3048 = vmatmul.f32.gmra.mxu0 %v2608
  %v3049 = vpop.f32.mrf.mxu0
  %v3050 = vadd.f32 %v2900, %v3049
  %3051 = vmatmul.f32.gmra.mxu0 %v2609
  %v3052 = vpop.f32.mrf.mxu0
  %v3053 = vadd.f32 %v2900, %v3052
  %3054 = vmatmul.f32.gmra.mxu0 %v2610
  %v3055 = vpop.f32.mrf.mxu0
  %v3056 = vadd.f32 %v2900, %v3055
  %3057 = vmatmul.f32.gmra.mxu0 %v2611
  %v3058 = vpop.f32.mrf.mxu0
  %v3059 = vadd.f32 %v2900, %v3058
  %3060 = vmatmul.f32.gmra.mxu0 %v2612
  %v3061 = vpop.f32.mrf.mxu0
  %v3062 = vadd.f32 %v2900, %v3061
  %3063 = vmatmul.f32.gmra.mxu0 %v2613
  %v3064 = vpop.f32.mrf.mxu0
  %v3065 = vadd.f32 %v2900, %v3064
  %3066 = vmatmul.f32.gmra.mxu0 %v2614
  %v3067 = vpop.f32.mrf.mxu0
  %v3068 = vadd.f32 %v2900, %v3067
  %3069 = vmatmul.f32.gmra.mxu0 %v2615
  %v3070 = vpop.f32.mrf.mxu0
  %v3071 = vadd.f32 %v2900, %v3070
  %3072 = vmatmul.f32.gmra.mxu0 %v2616
  %v3073 = vpop.f32.mrf.mxu0
  %v3074 = vadd.f32 %v2900, %v3073
  %3075 = vmatmul.f32.gmra.mxu0 %v2617
  %v3076 = vpop.f32.mrf.mxu0
  %v3077 = vadd.f32 %v2900, %v3076
  %3078 = vmatmul.f32.gmra.mxu0 %v2618
  %v3079 = vpop.f32.mrf.mxu0
  %v3080 = vadd.f32 %v2900, %v3079
  %3081 = vmatmul.f32.gmra.mxu0 %v2619
  %v3082 = vpop.f32.mrf.mxu0
  %v3083 = vadd.f32 %v2900, %v3082
  %3084 = vmatmul.f32.gmra.mxu0 %v2620
  %v3085 = vpop.f32.mrf.mxu0
  %v3086 = vadd.f32 %v2900, %v3085
  %3087 = vmatmul.f32.gmra.mxu0 %v2621
  %v3088 = vpop.f32.mrf.mxu0
  %v3089 = vadd.f32 %v2900, %v3088
  %3090 = vmatmul.f32.gmra.mxu0 %v2622
  %v3091 = vpop.f32.mrf.mxu0
  %v3092 = vadd.f32 %v2900, %v3091
  %3093 = vmatmul.f32.gmra.mxu0 %v2623
  %v3094 = vpop.f32.mrf.mxu0
  %v3095 = vadd.f32 %v2900, %v3094
  %3096 = vmatmul.f32.gmra.mxu0 %v2624
  %v3097 = vpop.f32.mrf.mxu0
  %v3098 = vadd.f32 %v2900, %v3097
  %3099 = vmatmul.f32.gmra.mxu0 %v2625
  %v3100 = vpop.f32.mrf.mxu0
  %v3101 = vadd.f32 %v2900, %v3100
  %3102 = vmatmul.f32.gmra.mxu0 %v2626
  %v3103 = vpop.f32.mrf.mxu0
  %v3104 = vadd.f32 %v2900, %v3103
  %3105 = vmatmul.f32.gmra.mxu0 %v2627
  %v3106 = vpop.f32.mrf.mxu0
  %v3107 = vadd.f32 %v2900, %v3106
  %3108 = vmatmul.f32.gmra.mxu0 %v2628
  %v3109 = vpop.f32.mrf.mxu0
  %v3110 = vadd.f32 %v2900, %v3109
  %3111 = vmatmul.f32.gmra.mxu0 %v2629
  %v3112 = vpop.f32.mrf.mxu0
  %v3113 = vadd.f32 %v2900, %v3112
  %3114 = vmatmul.f32.gmra.mxu0 %v2630
  %v3115 = vpop.f32.mrf.mxu0
  %v3116 = vadd.f32 %v2900, %v3115
  %3117 = vmatmul.f32.gmra.mxu0 %v2631
  %v3118 = vpop.f32.mrf.mxu0
  %v3119 = vadd.f32 %v2900, %v3118
  %3120 = vmatmul.f32.gmra.mxu0 %v2632
  %v3121 = vpop.f32.mrf.mxu0
  %v3122 = vadd.f32 %v2900, %v3121
  %3123 = vmatmul.f32.gmra.mxu0 %v2633
  %v3124 = vpop.f32.mrf.mxu0
  %v3125 = vadd.f32 %v2900, %v3124
  %3126 = vmatmul.f32.gmra.mxu0 %v2634
  %v3127 = vpop.f32.mrf.mxu0
  %v3128 = vadd.f32 %v2900, %v3127
  %3129 = vmatmul.f32.gmra.mxu0 %v2635
  %v3130 = vpop.f32.mrf.mxu0
  %v3131 = vadd.f32 %v2900, %v3130
  %3132 = vmatmul.f32.gmra.mxu0 %v2636
  %v3133 = vpop.f32.mrf.mxu0
  %v3134 = vadd.f32 %v2900, %v3133
  %3135 = vmatmul.f32.gmra.mxu0 %v2637
  %v3136 = vpop.f32.mrf.mxu0
  %v3137 = vadd.f32 %v2900, %v3136
  %3138 = vmatmul.f32.gmra.mxu0 %v2638
  %v3139 = vpop.f32.mrf.mxu0
  %v3140 = vadd.f32 %v2900, %v3139
  %3141 = vmatmul.f32.gmra.mxu0 %v2639
  %v3142 = vpop.f32.mrf.mxu0
  %v3143 = vadd.f32 %v2900, %v3142
  %3144 = vmatmul.f32.gmra.mxu0 %v2640
  %v3145 = vpop.f32.mrf.mxu0
  %v3146 = vadd.f32 %v2900, %v3145
  %3147 = vmatmul.f32.gmra.mxu0 %v2641
  %v3148 = vpop.f32.mrf.mxu0
  %v3149 = vadd.f32 %v2900, %v3148
  %3150 = vmatmul.f32.gmra.mxu0 %v2642
  %v3151 = vpop.f32.mrf.mxu0
  %v3152 = vadd.f32 %v2900, %v3151
  %3153 = vmatmul.f32.gmra.mxu0 %v2643
  %v3154 = vpop.f32.mrf.mxu0
  %v3155 = vadd.f32 %v2900, %v3154
  %3156 = vmatmul.f32.gmra.mxu0 %v2644
  %v3157 = vpop.f32.mrf.mxu0
  %v3158 = vadd.f32 %v2900, %v3157
  %3159 = vmatmul.f32.gmra.mxu0 %v2645
  %v3160 = vpop.f32.mrf.mxu0
  %v3161 = vadd.f32 %v2900, %v3160
  %3162 = vmatmul.f32.gmra.mxu0 %v2646
  %v3163 = vpop.f32.mrf.mxu0
  %v3164 = vadd.f32 %v2900, %v3163
  %3165 = vmatmul.f32.gmra.mxu0 %v2647
  %v3166 = vpop.f32.mrf.mxu0
  %v3167 = vadd.f32 %v2900, %v3166
  %3168 = vmatmul.f32.gmra.mxu0 %v2648
  %v3169 = vpop.f32.mrf.mxu0
  %v3170 = vadd.f32 %v2900, %v3169
  %3171 = vmatmul.f32.gmra.mxu0 %v2649
  %v3172 = vpop.f32.mrf.mxu0
  %v3173 = vadd.f32 %v2900, %v3172
  %3174 = vmatmul.f32.gmra.mxu0 %v2650
  %v3175 = vpop.f32.mrf.mxu0
  %v3176 = vadd.f32 %v2900, %v3175
  %3177 = vmatmul.f32.gmra.mxu0 %v2651
  %v3178 = vpop.f32.mrf.mxu0
  %v3179 = vadd.f32 %v2900, %v3178
  %3180 = vmatmul.f32.gmra.mxu0 %v2652
  %v3181 = vpop.f32.mrf.mxu0
  %v3182 = vadd.f32 %v2900, %v3181
  %3183 = vmatmul.f32.gmra.mxu0 %v2653
  %v3184 = vpop.f32.mrf.mxu0
  %v3185 = vadd.f32 %v2900, %v3184
  %3186 = vmatmul.f32.gmra.mxu0 %v2654
  %v3187 = vpop.f32.mrf.mxu0
  %v3188 = vadd.f32 %v2900, %v3187
  %3189 = vmatmul.f32.gmra.mxu0 %v2655
  %v3190 = vpop.f32.mrf.mxu0
  %v3191 = vadd.f32 %v2900, %v3190
  %3192 = vmatmul.f32.gmra.mxu0 %v2656
  %v3193 = vpop.f32.mrf.mxu0
  %v3194 = vadd.f32 %v2900, %v3193
  %3195 = vmatmul.f32.gmra.mxu0 %v2657
  %v3196 = vpop.f32.mrf.mxu0
  %v3197 = vadd.f32 %v2900, %v3196
  %3198 = vmatmul.f32.gmra.mxu0 %v2658
  %v3199 = vpop.f32.mrf.mxu0
  %v3200 = vadd.f32 %v2900, %v3199
  %3201 = vmatmul.f32.gmra.mxu0 %v2659
  %v3202 = vpop.f32.mrf.mxu0
  %v3203 = vadd.f32 %v2900, %v3202
  %3204 = vmatmul.f32.gmra.mxu0 %v2660
  %v3205 = vpop.f32.mrf.mxu0
  %v3206 = vadd.f32 %v2900, %v3205
  %3207 = vmatmul.f32.gmra.mxu0 %v2661
  %v3208 = vpop.f32.mrf.mxu0
  %v3209 = vadd.f32 %v2900, %v3208
  %3210 = vmatmul.f32.gmra.mxu0 %v2662
  %v3211 = vpop.f32.mrf.mxu0
  %v3212 = vadd.f32 %v2900, %v3211
  %3213 = vmatmul.f32.gmra.mxu0 %v2663
  %v3214 = vpop.f32.mrf.mxu0
  %v3215 = vadd.f32 %v2900, %v3214
  %3216 = vmatmul.f32.gmra.mxu0 %v2664
  %v3217 = vpop.f32.mrf.mxu0
  %v3218 = vadd.f32 %v2900, %v3217
  %3219 = vmatmul.f32.gmra.mxu0 %v2665
  %v3220 = vpop.f32.mrf.mxu0
  %v3221 = vadd.f32 %v2900, %v3220
  %3222 = vmatmul.f32.gmra.mxu0 %v2666
  %v3223 = vpop.f32.mrf.mxu0
  %v3224 = vadd.f32 %v2900, %v3223
  %3225 = vmatmul.f32.gmra.mxu0 %v2667
  %v3226 = vpop.f32.mrf.mxu0
  %v3227 = vadd.f32 %v2900, %v3226
  %3228 = vmatmul.f32.gmra.mxu0 %v2668
  %v3229 = vpop.f32.mrf.mxu0
  %v3230 = vadd.f32 %v2900, %v3229
  %3231 = vmatmul.f32.gmra.mxu0 %v2669
  %v3232 = vpop.f32.mrf.mxu0
  %v3233 = vadd.f32 %v2900, %v3232
  %3234 = vdwg.mxu0
  %3235 = vmatpush.msra.mxu0 %v2893
  %3236 = vmatpush.msra.mxu0 %v2892
  %3237 = vmatpush.msra.mxu0 %v2891
  %3238 = vmatpush.msra.mxu0 %v2890
  %3239 = vmatpush.msra.mxu0 %v2889
  %3240 = vmatpush.msra.mxu0 %v2888
  %3241 = vmatpush.msra.mxu0 %v2887
  %3242 = vmatpush.msra.mxu0 %v2886
  %3243 = vmatpush.msra.mxu0 %v2885
  %3244 = vmatpush.msra.mxu0 %v2884
  %3245 = vmatpush.msra.mxu0 %v2883
  %3246 = vmatpush.msra.mxu0 %v2882
  %3247 = vmatpush.msra.mxu0 %v2881
  %3248 = vmatpush.msra.mxu0 %v2880
  %3249 = vmatpush.msra.mxu0 %v2879
  %3250 = vmatpush.msra.mxu0 %v2878
  %3251 = vmatmul.f32.gmra.mxu0 %v2798
  %v3252 = vpop.f32.mrf.mxu0
  %v3253 = vadd.f32 %v3044, %v3252
  %3254 = vmatmul.f32.gmra.mxu0 %v2799
  %v3255 = vpop.f32.mrf.mxu0
  %v3256 = vadd.f32 %v3047, %v3255
  %3257 = vmatmul.f32.gmra.mxu0 %v2800
  %v3258 = vpop.f32.mrf.mxu0
  %v3259 = vadd.f32 %v3050, %v3258
  %3260 = vmatmul.f32.gmra.mxu0 %v2801
  %v3261 = vpop.f32.mrf.mxu0
  %v3262 = vadd.f32 %v3053, %v3261
  %3263 = vmatmul.f32.gmra.mxu0 %v2802
  %v3264 = vpop.f32.mrf.mxu0
  %v3265 = vadd.f32 %v3056, %v3264
  %3266 = vmatmul.f32.gmra.mxu0 %v2803
  %v3267 = vpop.f32.mrf.mxu0
  %v3268 = vadd.f32 %v3059, %v3267
  %3269 = vmatmul.f32.gmra.mxu0 %v2804
  %v3270 = vpop.f32.mrf.mxu0
  %v3271 = vadd.f32 %v3062, %v3270
  %3272 = vmatmul.f32.gmra.mxu0 %v2805
  %v3273 = vpop.f32.mrf.mxu0
  %v3274 = vadd.f32 %v3065, %v3273
  %3275 = vmatmul.f32.gmra.mxu0 %v2806
  %v3276 = vpop.f32.mrf.mxu0
  %v3277 = vadd.f32 %v3068, %v3276
  %3278 = vmatmul.f32.gmra.mxu0 %v2807
  %v3279 = vpop.f32.mrf.mxu0
  %v3280 = vadd.f32 %v3071, %v3279
  %3281 = vmatmul.f32.gmra.mxu0 %v2808
  %v3282 = vpop.f32.mrf.mxu0
  %v3283 = vadd.f32 %v3074, %v3282
  %3284 = vmatmul.f32.gmra.mxu0 %v2809
  %v3285 = vpop.f32.mrf.mxu0
  %v3286 = vadd.f32 %v3077, %v3285
  %3287 = vmatmul.f32.gmra.mxu0 %v2810
  %v3288 = vpop.f32.mrf.mxu0
  %v3289 = vadd.f32 %v3080, %v3288
  %3290 = vmatmul.f32.gmra.mxu0 %v2811
  %v3291 = vpop.f32.mrf.mxu0
  %v3292 = vadd.f32 %v3083, %v3291
  %3293 = vmatmul.f32.gmra.mxu0 %v2812
  %v3294 = vpop.f32.mrf.mxu0
  %v3295 = vadd.f32 %v3086, %v3294
  %3296 = vmatmul.f32.gmra.mxu0 %v2813
  %v3297 = vpop.f32.mrf.mxu0
  %v3298 = vadd.f32 %v3089, %v3297
  %3299 = vmatmul.f32.gmra.mxu0 %v2814
  %v3300 = vpop.f32.mrf.mxu0
  %v3301 = vadd.f32 %v3092, %v3300
  %3302 = vmatmul.f32.gmra.mxu0 %v2815
  %v3303 = vpop.f32.mrf.mxu0
  %v3304 = vadd.f32 %v3095, %v3303
  %3305 = vmatmul.f32.gmra.mxu0 %v2816
  %v3306 = vpop.f32.mrf.mxu0
  %v3307 = vadd.f32 %v3098, %v3306
  %3308 = vmatmul.f32.gmra.mxu0 %v2817
  %v3309 = vpop.f32.mrf.mxu0
  %v3310 = vadd.f32 %v3101, %v3309
  %3311 = vmatmul.f32.gmra.mxu0 %v2818
  %v3312 = vpop.f32.mrf.mxu0
  %v3313 = vadd.f32 %v3104, %v3312
  %3314 = vmatmul.f32.gmra.mxu0 %v2819
  %v3315 = vpop.f32.mrf.mxu0
  %v3316 = vadd.f32 %v3107, %v3315
  %3317 = vmatmul.f32.gmra.mxu0 %v2820
  %v3318 = vpop.f32.mrf.mxu0
  %v3319 = vadd.f32 %v3110, %v3318
  %3320 = vmatmul.f32.gmra.mxu0 %v2821
  %v3321 = vpop.f32.mrf.mxu0
  %v3322 = vadd.f32 %v3113, %v3321
  %3323 = vmatmul.f32.gmra.mxu0 %v2822
  %v3324 = vpop.f32.mrf.mxu0
  %v3325 = vadd.f32 %v3116, %v3324
  %3326 = vmatmul.f32.gmra.mxu0 %v2823
  %v3327 = vpop.f32.mrf.mxu0
  %v3328 = vadd.f32 %v3119, %v3327
  %3329 = vmatmul.f32.gmra.mxu0 %v2824
  %v3330 = vpop.f32.mrf.mxu0
  %v3331 = vadd.f32 %v3122, %v3330
  %3332 = vmatmul.f32.gmra.mxu0 %v2825
  %v3333 = vpop.f32.mrf.mxu0
  %v3334 = vadd.f32 %v3125, %v3333
  %3335 = vmatmul.f32.gmra.mxu0 %v2826
  %v3336 = vpop.f32.mrf.mxu0
  %v3337 = vadd.f32 %v3128, %v3336
  %3338 = vmatmul.f32.gmra.mxu0 %v2827
  %v3339 = vpop.f32.mrf.mxu0
  %v3340 = vadd.f32 %v3131, %v3339
  %3341 = vmatmul.f32.gmra.mxu0 %v2828
  %v3342 = vpop.f32.mrf.mxu0
  %v3343 = vadd.f32 %v3134, %v3342
  %3344 = vmatmul.f32.gmra.mxu0 %v2829
  %v3345 = vpop.f32.mrf.mxu0
  %v3346 = vadd.f32 %v3137, %v3345
  %3347 = vmatmul.f32.gmra.mxu0 %v2830
  %v3348 = vpop.f32.mrf.mxu0
  %v3349 = vadd.f32 %v3140, %v3348
  %3350 = vmatmul.f32.gmra.mxu0 %v2831
  %v3351 = vpop.f32.mrf.mxu0
  %v3352 = vadd.f32 %v3143, %v3351
  %3353 = vmatmul.f32.gmra.mxu0 %v2832
  %v3354 = vpop.f32.mrf.mxu0
  %v3355 = vadd.f32 %v3146, %v3354
  %3356 = vmatmul.f32.gmra.mxu0 %v2833
  %v3357 = vpop.f32.mrf.mxu0
  %v3358 = vadd.f32 %v3149, %v3357
  %3359 = vmatmul.f32.gmra.mxu0 %v2834
  %v3360 = vpop.f32.mrf.mxu0
  %v3361 = vadd.f32 %v3152, %v3360
  %3362 = vmatmul.f32.gmra.mxu0 %v2835
  %v3363 = vpop.f32.mrf.mxu0
  %v3364 = vadd.f32 %v3155, %v3363
  %3365 = vmatmul.f32.gmra.mxu0 %v2836
  %v3366 = vpop.f32.mrf.mxu0
  %v3367 = vadd.f32 %v3158, %v3366
  %3368 = vmatmul.f32.gmra.mxu0 %v2837
  %v3369 = vpop.f32.mrf.mxu0
  %v3370 = vadd.f32 %v3161, %v3369
  %3371 = vmatmul.f32.gmra.mxu0 %v2838
  %v3372 = vpop.f32.mrf.mxu0
  %v3373 = vadd.f32 %v3164, %v3372
  %3374 = vmatmul.f32.gmra.mxu0 %v2839
  %v3375 = vpop.f32.mrf.mxu0
  %v3376 = vadd.f32 %v3167, %v3375
  %3377 = vmatmul.f32.gmra.mxu0 %v2840
  %v3378 = vpop.f32.mrf.mxu0
  %v3379 = vadd.f32 %v3170, %v3378
  %3380 = vmatmul.f32.gmra.mxu0 %v2841
  %v3381 = vpop.f32.mrf.mxu0
  %v3382 = vadd.f32 %v3173, %v3381
  %3383 = vmatmul.f32.gmra.mxu0 %v2842
  %v3384 = vpop.f32.mrf.mxu0
  %v3385 = vadd.f32 %v3176, %v3384
  %3386 = vmatmul.f32.gmra.mxu0 %v2843
  %v3387 = vpop.f32.mrf.mxu0
  %v3388 = vadd.f32 %v3179, %v3387
  %3389 = vmatmul.f32.gmra.mxu0 %v2844
  %v3390 = vpop.f32.mrf.mxu0
  %v3391 = vadd.f32 %v3182, %v3390
  %3392 = vmatmul.f32.gmra.mxu0 %v2845
  %v3393 = vpop.f32.mrf.mxu0
  %v3394 = vadd.f32 %v3185, %v3393
  %3395 = vmatmul.f32.gmra.mxu0 %v2846
  %v3396 = vpop.f32.mrf.mxu0
  %v3397 = vadd.f32 %v3188, %v3396
  %3398 = vmatmul.f32.gmra.mxu0 %v2847
  %v3399 = vpop.f32.mrf.mxu0
  %v3400 = vadd.f32 %v3191, %v3399
  %3401 = vmatmul.f32.gmra.mxu0 %v2848
  %v3402 = vpop.f32.mrf.mxu0
  %v3403 = vadd.f32 %v3194, %v3402
  %3404 = vmatmul.f32.gmra.mxu0 %v2849
  %v3405 = vpop.f32.mrf.mxu0
  %v3406 = vadd.f32 %v3197, %v3405
  %3407 = vmatmul.f32.gmra.mxu0 %v2850
  %v3408 = vpop.f32.mrf.mxu0
  %v3409 = vadd.f32 %v3200, %v3408
  %3410 = vmatmul.f32.gmra.mxu0 %v2851
  %v3411 = vpop.f32.mrf.mxu0
  %v3412 = vadd.f32 %v3203, %v3411
  %3413 = vmatmul.f32.gmra.mxu0 %v2852
  %v3414 = vpop.f32.mrf.mxu0
  %v3415 = vadd.f32 %v3206, %v3414
  %3416 = vmatmul.f32.gmra.mxu0 %v2853
  %v3417 = vpop.f32.mrf.mxu0
  %v3418 = vadd.f32 %v3209, %v3417
  %3419 = vmatmul.f32.gmra.mxu0 %v2854
  %v3420 = vpop.f32.mrf.mxu0
  %v3421 = vadd.f32 %v3212, %v3420
  %3422 = vmatmul.f32.gmra.mxu0 %v2855
  %v3423 = vpop.f32.mrf.mxu0
  %v3424 = vadd.f32 %v3215, %v3423
  %3425 = vmatmul.f32.gmra.mxu0 %v2856
  %v3426 = vpop.f32.mrf.mxu0
  %v3427 = vadd.f32 %v3218, %v3426
  %3428 = vmatmul.f32.gmra.mxu0 %v2857
  %v3429 = vpop.f32.mrf.mxu0
  %v3430 = vadd.f32 %v3221, %v3429
  %3431 = vmatmul.f32.gmra.mxu0 %v2858
  %v3432 = vpop.f32.mrf.mxu0
  %v3433 = vadd.f32 %v3224, %v3432
  %3434 = vmatmul.f32.gmra.mxu0 %v2859
  %v3435 = vpop.f32.mrf.mxu0
  %v3436 = vadd.f32 %v3227, %v3435
  %3437 = vmatmul.f32.gmra.mxu0 %v2860
  %v3438 = vpop.f32.mrf.mxu0
  %v3439 = vadd.f32 %v3230, %v3438
  %3440 = vmatmul.f32.gmra.mxu0 %v2861
  %v3441 = vpop.f32.mrf.mxu0
  %v3442 = vadd.f32 %v3233, %v3441
  %3443 = vdwg.mxu0
  %3444 = vmatpush.msra.mxu0 0.0
  %3445 = vmatpush.msra.mxu0 0.0
  %3446 = vmatpush.msra.mxu0 0.0
  %3447 = vmatpush.msra.mxu0 0.0
  %3448 = vmatpush.msra.mxu0 0.0
  %3449 = vmatpush.msra.mxu0 0.0
  %3450 = vmatpush.msra.mxu0 0.0
  %3451 = vmatpush.msra.mxu0 0.0
  %3452 = vmatpush.msra.mxu0 0.0
  %3453 = vmatpush.msra.mxu0 0.0
  %3454 = vmatpush.msra.mxu0 0.0
  %3455 = vmatpush.msra.mxu0 0.0
  %3456 = vmatpush.msra.mxu0 %v2897
  %3457 = vmatpush.msra.mxu0 %v2896
  %3458 = vmatpush.msra.mxu0 %v2895
  %3459 = vmatpush.msra.mxu0 %v2894
  %3460 = vmatmul.f32.gmra.mxu0 %v2902
  %v3461 = vpop.f32.mrf.mxu0
  %v3462 = vadd.f32 %v3253, %v3461
  %3463 = vmatmul.f32.gmra.mxu0 %v2904
  %v3464 = vpop.f32.mrf.mxu0
  %v3465 = vadd.f32 %v3256, %v3464
  %3466 = vmatmul.f32.gmra.mxu0 %v2906
  %v3467 = vpop.f32.mrf.mxu0
  %v3468 = vadd.f32 %v3259, %v3467
  %3469 = vmatmul.f32.gmra.mxu0 %v2908
  %v3470 = vpop.f32.mrf.mxu0
  %v3471 = vadd.f32 %v3262, %v3470
  %3472 = vmatmul.f32.gmra.mxu0 %v2910
  %v3473 = vpop.f32.mrf.mxu0
  %v3474 = vadd.f32 %v3265, %v3473
  %3475 = vmatmul.f32.gmra.mxu0 %v2912
  %v3476 = vpop.f32.mrf.mxu0
  %v3477 = vadd.f32 %v3268, %v3476
  %3478 = vmatmul.f32.gmra.mxu0 %v2914
  %v3479 = vpop.f32.mrf.mxu0
  %v3480 = vadd.f32 %v3271, %v3479
  %3481 = vmatmul.f32.gmra.mxu0 %v2916
  %v3482 = vpop.f32.mrf.mxu0
  %v3483 = vadd.f32 %v3274, %v3482
  %3484 = vmatmul.f32.gmra.mxu0 %v2918
  %v3485 = vpop.f32.mrf.mxu0
  %v3486 = vadd.f32 %v3277, %v3485
  %3487 = vmatmul.f32.gmra.mxu0 %v2920
  %v3488 = vpop.f32.mrf.mxu0
  %v3489 = vadd.f32 %v3280, %v3488
  %3490 = vmatmul.f32.gmra.mxu0 %v2922
  %v3491 = vpop.f32.mrf.mxu0
  %v3492 = vadd.f32 %v3283, %v3491
  %3493 = vmatmul.f32.gmra.mxu0 %v2924
  %v3494 = vpop.f32.mrf.mxu0
  %v3495 = vadd.f32 %v3286, %v3494
  %3496 = vmatmul.f32.gmra.mxu0 %v2926
  %v3497 = vpop.f32.mrf.mxu0
  %v3498 = vadd.f32 %v3289, %v3497
  %3499 = vmatmul.f32.gmra.mxu0 %v2928
  %v3500 = vpop.f32.mrf.mxu0
  %v3501 = vadd.f32 %v3292, %v3500
  %3502 = vmatmul.f32.gmra.mxu0 %v2930
  %v3503 = vpop.f32.mrf.mxu0
  %v3504 = vadd.f32 %v3295, %v3503
  %3505 = vmatmul.f32.gmra.mxu0 %v2932
  %v3506 = vpop.f32.mrf.mxu0
  %v3507 = vadd.f32 %v3298, %v3506
  %3508 = vmatmul.f32.gmra.mxu0 %v2934
  %v3509 = vpop.f32.mrf.mxu0
  %v3510 = vadd.f32 %v3301, %v3509
  %3511 = vmatmul.f32.gmra.mxu0 %v2936
  %v3512 = vpop.f32.mrf.mxu0
  %v3513 = vadd.f32 %v3304, %v3512
  %3514 = vmatmul.f32.gmra.mxu0 %v2938
  %v3515 = vpop.f32.mrf.mxu0
  %v3516 = vadd.f32 %v3307, %v3515
  %3517 = vmatmul.f32.gmra.mxu0 %v2940
  %v3518 = vpop.f32.mrf.mxu0
  %v3519 = vadd.f32 %v3310, %v3518
  %3520 = vmatmul.f32.gmra.mxu0 %v2942
  %v3521 = vpop.f32.mrf.mxu0
  %v3522 = vadd.f32 %v3313, %v3521
  %3523 = vmatmul.f32.gmra.mxu0 %v2944
  %v3524 = vpop.f32.mrf.mxu0
  %v3525 = vadd.f32 %v3316, %v3524
  %3526 = vmatmul.f32.gmra.mxu0 %v2946
  %v3527 = vpop.f32.mrf.mxu0
  %v3528 = vadd.f32 %v3319, %v3527
  %3529 = vmatmul.f32.gmra.mxu0 %v2948
  %v3530 = vpop.f32.mrf.mxu0
  %v3531 = vadd.f32 %v3322, %v3530
  %3532 = vmatmul.f32.gmra.mxu0 %v2950
  %v3533 = vpop.f32.mrf.mxu0
  %v3534 = vadd.f32 %v3325, %v3533
  %3535 = vmatmul.f32.gmra.mxu0 %v2952
  %v3536 = vpop.f32.mrf.mxu0
  %v3537 = vadd.f32 %v3328, %v3536
  %3538 = vmatmul.f32.gmra.mxu0 %v2954
  %v3539 = vpop.f32.mrf.mxu0
  %v3540 = vadd.f32 %v3331, %v3539
  %3541 = vmatmul.f32.gmra.mxu0 %v2956
  %v3542 = vpop.f32.mrf.mxu0
  %v3543 = vadd.f32 %v3334, %v3542
  %3544 = vmatmul.f32.gmra.mxu0 %v2958
  %v3545 = vpop.f32.mrf.mxu0
  %v3546 = vadd.f32 %v3337, %v3545
  %3547 = vmatmul.f32.gmra.mxu0 %v2960
  %v3548 = vpop.f32.mrf.mxu0
  %v3549 = vadd.f32 %v3340, %v3548
  %3550 = vmatmul.f32.gmra.mxu0 %v2962
  %v3551 = vpop.f32.mrf.mxu0
  %v3552 = vadd.f32 %v3343, %v3551
  %3553 = vmatmul.f32.gmra.mxu0 %v2964
  %v3554 = vpop.f32.mrf.mxu0
  %v3555 = vadd.f32 %v3346, %v3554
  %3556 = vmatmul.f32.gmra.mxu0 %v2966
  %v3557 = vpop.f32.mrf.mxu0
  %v3558 = vadd.f32 %v3349, %v3557
  %3559 = vmatmul.f32.gmra.mxu0 %v2968
  %v3560 = vpop.f32.mrf.mxu0
  %v3561 = vadd.f32 %v3352, %v3560
  %3562 = vmatmul.f32.gmra.mxu0 %v2970
  %v3563 = vpop.f32.mrf.mxu0
  %v3564 = vadd.f32 %v3355, %v3563
  %3565 = vmatmul.f32.gmra.mxu0 %v2972
  %v3566 = vpop.f32.mrf.mxu0
  %v3567 = vadd.f32 %v3358, %v3566
  %3568 = vmatmul.f32.gmra.mxu0 %v2974
  %v3569 = vpop.f32.mrf.mxu0
  %v3570 = vadd.f32 %v3361, %v3569
  %3571 = vmatmul.f32.gmra.mxu0 %v2976
  %v3572 = vpop.f32.mrf.mxu0
  %v3573 = vadd.f32 %v3364, %v3572
  %3574 = vmatmul.f32.gmra.mxu0 %v2978
  %v3575 = vpop.f32.mrf.mxu0
  %v3576 = vadd.f32 %v3367, %v3575
  %3577 = vmatmul.f32.gmra.mxu0 %v2980
  %v3578 = vpop.f32.mrf.mxu0
  %v3579 = vadd.f32 %v3370, %v3578
  %3580 = vmatmul.f32.gmra.mxu0 %v2982
  %v3581 = vpop.f32.mrf.mxu0
  %v3582 = vadd.f32 %v3373, %v3581
  %3583 = vmatmul.f32.gmra.mxu0 %v2984
  %v3584 = vpop.f32.mrf.mxu0
  %v3585 = vadd.f32 %v3376, %v3584
  %3586 = vmatmul.f32.gmra.mxu0 %v2986
  %v3587 = vpop.f32.mrf.mxu0
  %v3588 = vadd.f32 %v3379, %v3587
  %3589 = vmatmul.f32.gmra.mxu0 %v2988
  %v3590 = vpop.f32.mrf.mxu0
  %v3591 = vadd.f32 %v3382, %v3590
  %3592 = vmatmul.f32.gmra.mxu0 %v2990
  %v3593 = vpop.f32.mrf.mxu0
  %v3594 = vadd.f32 %v3385, %v3593
  %3595 = vmatmul.f32.gmra.mxu0 %v2992
  %v3596 = vpop.f32.mrf.mxu0
  %v3597 = vadd.f32 %v3388, %v3596
  %3598 = vmatmul.f32.gmra.mxu0 %v2994
  %v3599 = vpop.f32.mrf.mxu0
  %v3600 = vadd.f32 %v3391, %v3599
  %3601 = vmatmul.f32.gmra.mxu0 %v2996
  %v3602 = vpop.f32.mrf.mxu0
  %v3603 = vadd.f32 %v3394, %v3602
  %3604 = vmatmul.f32.gmra.mxu0 %v2998
  %v3605 = vpop.f32.mrf.mxu0
  %v3606 = vadd.f32 %v3397, %v3605
  %3607 = vmatmul.f32.gmra.mxu0 %v3000
  %v3608 = vpop.f32.mrf.mxu0
  %v3609 = vadd.f32 %v3400, %v3608
  %3610 = vmatmul.f32.gmra.mxu0 %v3002
  %v3611 = vpop.f32.mrf.mxu0
  %v3612 = vadd.f32 %v3403, %v3611
  %3613 = vmatmul.f32.gmra.mxu0 %v3004
  %v3614 = vpop.f32.mrf.mxu0
  %v3615 = vadd.f32 %v3406, %v3614
  %3616 = vmatmul.f32.gmra.mxu0 %v3006
  %v3617 = vpop.f32.mrf.mxu0
  %v3618 = vadd.f32 %v3409, %v3617
  %3619 = vmatmul.f32.gmra.mxu0 %v3008
  %v3620 = vpop.f32.mrf.mxu0
  %v3621 = vadd.f32 %v3412, %v3620
  %3622 = vmatmul.f32.gmra.mxu0 %v3010
  %v3623 = vpop.f32.mrf.mxu0
  %v3624 = vadd.f32 %v3415, %v3623
  %3625 = vmatmul.f32.gmra.mxu0 %v3012
  %v3626 = vpop.f32.mrf.mxu0
  %v3627 = vadd.f32 %v3418, %v3626
  %3628 = vmatmul.f32.gmra.mxu0 %v3014
  %v3629 = vpop.f32.mrf.mxu0
  %v3630 = vadd.f32 %v3421, %v3629
  %3631 = vmatmul.f32.gmra.mxu0 %v3016
  %v3632 = vpop.f32.mrf.mxu0
  %v3633 = vadd.f32 %v3424, %v3632
  %3634 = vmatmul.f32.gmra.mxu0 %v3018
  %v3635 = vpop.f32.mrf.mxu0
  %v3636 = vadd.f32 %v3427, %v3635
  %3637 = vmatmul.f32.gmra.mxu0 %v3020
  %v3638 = vpop.f32.mrf.mxu0
  %v3639 = vadd.f32 %v3430, %v3638
  %3640 = vmatmul.f32.gmra.mxu0 %v3022
  %v3641 = vpop.f32.mrf.mxu0
  %v3642 = vadd.f32 %v3433, %v3641
  %3643 = vmatmul.f32.gmra.mxu0 %v3024
  %v3644 = vpop.f32.mrf.mxu0
  %v3645 = vadd.f32 %v3436, %v3644
  %3646 = vmatmul.f32.gmra.mxu0 %v2962
  %v3647 = vpop.f32.mrf.mxu0
  %v3648 = vadd.f32 %v3439, %v3647
  %3649 = vmatmul.f32.gmra.mxu0 %v2964
  %v3650 = vpop.f32.mrf.mxu0
  %v3651 = vadd.f32 %v3442, %v3650
  %3652 = vdwg.mxu0
  %v3653 = vmax.f32 %v3462, 0.0
  %v3654 = vmax.f32 %v3465, 0.0
  %v3655 = vmax.f32 %v3468, 0.0
  %v3656 = vmax.f32 %v3471, 0.0
  %v3657 = vmax.f32 %v3474, 0.0
  %v3658 = vmax.f32 %v3477, 0.0
  %v3659 = vmax.f32 %v3480, 0.0
  %v3660 = vmax.f32 %v3483, 0.0
  %v3661 = vmax.f32 %v3486, 0.0
  %v3662 = vmax.f32 %v3489, 0.0
  %v3663 = vmax.f32 %v3492, 0.0
  %v3664 = vmax.f32 %v3495, 0.0
  %v3665 = vmax.f32 %v3498, 0.0
  %v3666 = vmax.f32 %v3501, 0.0
  %v3667 = vmax.f32 %v3504, 0.0
  %v3668 = vmax.f32 %v3507, 0.0
  %v3669 = vmax.f32 %v3510, 0.0
  %v3670 = vmax.f32 %v3513, 0.0
  %v3671 = vmax.f32 %v3516, 0.0
  %v3672 = vmax.f32 %v3519, 0.0
  %v3673 = vmax.f32 %v3522, 0.0
  %v3674 = vmax.f32 %v3525, 0.0
  %v3675 = vmax.f32 %v3528, 0.0
  %v3676 = vmax.f32 %v3531, 0.0
  %v3677 = vmax.f32 %v3534, 0.0
  %v3678 = vmax.f32 %v3537, 0.0
  %v3679 = vmax.f32 %v3540, 0.0
  %v3680 = vmax.f32 %v3543, 0.0
  %v3681 = vmax.f32 %v3546, 0.0
  %v3682 = vmax.f32 %v3549, 0.0
  %v3683 = vmax.f32 %v3552, 0.0
  %v3684 = vmax.f32 %v3555, 0.0
  %v3685 = vmax.f32 %v3558, 0.0
  %v3686 = vmax.f32 %v3561, 0.0
  %v3687 = vmax.f32 %v3564, 0.0
  %v3688 = vmax.f32 %v3567, 0.0
  %v3689 = vmax.f32 %v3570, 0.0
  %v3690 = vmax.f32 %v3573, 0.0
  %v3691 = vmax.f32 %v3576, 0.0
  %v3692 = vmax.f32 %v3579, 0.0
  %v3693 = vmax.f32 %v3582, 0.0
  %v3694 = vmax.f32 %v3585, 0.0
  %v3695 = vmax.f32 %v3588, 0.0
  %v3696 = vmax.f32 %v3591, 0.0
  %v3697 = vmax.f32 %v3594, 0.0
  %v3698 = vmax.f32 %v3597, 0.0
  %v3699 = vmax.f32 %v3600, 0.0
  %v3700 = vmax.f32 %v3603, 0.0
  %v3701 = vmax.f32 %v3606, 0.0
  %v3702 = vmax.f32 %v3609, 0.0
  %v3703 = vmax.f32 %v3612, 0.0
  %v3704 = vmax.f32 %v3615, 0.0
  %v3705 = vmax.f32 %v3618, 0.0
  %v3706 = vmax.f32 %v3621, 0.0
  %v3707 = vmax.f32 %v3624, 0.0
  %v3708 = vmax.f32 %v3627, 0.0
  %v3709 = vmax.f32 %v3630, 0.0
  %v3710 = vmax.f32 %v3633, 0.0
  %v3711 = vmax.f32 %v3636, 0.0
  %v3712 = vmax.f32 %v3639, 0.0
  %v3713 = vmax.f32 %v3642, 0.0
  %v3714 = vmax.f32 %v3645, 0.0
  %v3715 = vmax.f32 %v3648, 0.0
  %v3716 = vmax.f32 %v3651, 0.0
  %3717 = vxpose.xlu0.b32.start [1/16] %v3653, 128
  %3718 = vxpose.xlu0.b32.cont [2/16] %v3654, 128
  %3719 = vxpose.xlu0.b32.cont [3/16] %v3655, 128
  %3720 = vxpose.xlu0.b32.cont [4/16] %v3656, 128
  %3721 = vxpose.xlu0.b32.cont [5/16] %v3657, 128
  %3722 = vxpose.xlu0.b32.cont [6/16] %v3658, 128
  %3723 = vxpose.xlu0.b32.cont [7/16] %v3659, 128
  %3724 = vxpose.xlu0.b32.cont [8/16] %v3660, 128
  %3725 = vxpose.xlu0.b32.cont [9/16] %v3661, 128
  %3726 = vxpose.xlu0.b32.cont [10/16] %v3662, 128
  %3727 = vxpose.xlu0.b32.cont [11/16] %v3663, 128
  %3728 = vxpose.xlu0.b32.cont [12/16] %v3664, 128
  %3729 = vxpose.xlu0.b32.cont [13/16] %v3665, 128
  %3730 = vxpose.xlu0.b32.cont [14/16] %v3666, 128
  %3731 = vxpose.xlu0.b32.cont [15/16] %v3667, 128
  %3732 = vxpose.xlu0.b32.end [16/16] %v3668, 128
  %v3733 = vpop.trf.xlu0
  %v3734 = vpop.trf.xlu0
  %v3735 = vpop.trf.xlu0
  %v3736 = vpop.trf.xlu0
  %v3737 = vpop.trf.xlu0
  %v3738 = vpop.trf.xlu0
  %v3739 = vpop.trf.xlu0
  %v3740 = vpop.trf.xlu0
  %v3741 = vpop.trf.xlu0
  %v3742 = vpop.trf.xlu0
  %v3743 = vpop.trf.xlu0
  %v3744 = vpop.trf.xlu0
  %v3745 = vpop.trf.xlu0
  %v3746 = vpop.trf.xlu0
  %v3747 = vpop.trf.xlu0
  %v3748 = vpop.trf.xlu0
  %3749 = vxpose.xlu0.b32.start [1/16] %v3669, 128
  %3750 = vxpose.xlu0.b32.cont [2/16] %v3670, 128
  %3751 = vxpose.xlu0.b32.cont [3/16] %v3671, 128
  %3752 = vxpose.xlu0.b32.cont [4/16] %v3672, 128
  %3753 = vxpose.xlu0.b32.cont [5/16] %v3673, 128
  %3754 = vxpose.xlu0.b32.cont [6/16] %v3674, 128
  %3755 = vxpose.xlu0.b32.cont [7/16] %v3675, 128
  %3756 = vxpose.xlu0.b32.cont [8/16] %v3676, 128
  %3757 = vxpose.xlu0.b32.cont [9/16] %v3677, 128
  %3758 = vxpose.xlu0.b32.cont [10/16] %v3678, 128
  %3759 = vxpose.xlu0.b32.cont [11/16] %v3679, 128
  %3760 = vxpose.xlu0.b32.cont [12/16] %v3680, 128
  %3761 = vxpose.xlu0.b32.cont [13/16] %v3681, 128
  %3762 = vxpose.xlu0.b32.cont [14/16] %v3682, 128
  %3763 = vxpose.xlu0.b32.cont [15/16] %v3683, 128
  %3764 = vxpose.xlu0.b32.end [16/16] %v3684, 128
  %v3765 = vpop.trf.xlu0
  %v3766 = vpop.trf.xlu0
  %v3767 = vpop.trf.xlu0
  %v3768 = vpop.trf.xlu0
  %v3769 = vpop.trf.xlu0
  %v3770 = vpop.trf.xlu0
  %v3771 = vpop.trf.xlu0
  %v3772 = vpop.trf.xlu0
  %v3773 = vpop.trf.xlu0
  %v3774 = vpop.trf.xlu0
  %v3775 = vpop.trf.xlu0
  %v3776 = vpop.trf.xlu0
  %v3777 = vpop.trf.xlu0
  %v3778 = vpop.trf.xlu0
  %v3779 = vpop.trf.xlu0
  %v3780 = vpop.trf.xlu0
  %3781 = vxpose.xlu0.b32.start [1/16] %v3685, 128
  %3782 = vxpose.xlu0.b32.cont [2/16] %v3686, 128
  %3783 = vxpose.xlu0.b32.cont [3/16] %v3687, 128
  %3784 = vxpose.xlu0.b32.cont [4/16] %v3688, 128
  %3785 = vxpose.xlu0.b32.cont [5/16] %v3689, 128
  %3786 = vxpose.xlu0.b32.cont [6/16] %v3690, 128
  %3787 = vxpose.xlu0.b32.cont [7/16] %v3691, 128
  %3788 = vxpose.xlu0.b32.cont [8/16] %v3692, 128
  %3789 = vxpose.xlu0.b32.cont [9/16] %v3693, 128
  %3790 = vxpose.xlu0.b32.cont [10/16] %v3694, 128
  %3791 = vxpose.xlu0.b32.cont [11/16] %v3695, 128
  %3792 = vxpose.xlu0.b32.cont [12/16] %v3696, 128
  %3793 = vxpose.xlu0.b32.cont [13/16] %v3697, 128
  %3794 = vxpose.xlu0.b32.cont [14/16] %v3698, 128
  %3795 = vxpose.xlu0.b32.cont [15/16] %v3699, 128
  %3796 = vxpose.xlu0.b32.end [16/16] %v3700, 128
  %v3797 = vpop.trf.xlu0
  %v3798 = vpop.trf.xlu0
  %v3799 = vpop.trf.xlu0
  %v3800 = vpop.trf.xlu0
  %v3801 = vpop.trf.xlu0
  %v3802 = vpop.trf.xlu0
  %v3803 = vpop.trf.xlu0
  %v3804 = vpop.trf.xlu0
  %v3805 = vpop.trf.xlu0
  %v3806 = vpop.trf.xlu0
  %v3807 = vpop.trf.xlu0
  %v3808 = vpop.trf.xlu0
  %v3809 = vpop.trf.xlu0
  %v3810 = vpop.trf.xlu0
  %v3811 = vpop.trf.xlu0
  %v3812 = vpop.trf.xlu0
  %3813 = vxpose.xlu0.b32.start [1/16] %v3701, 128
  %3814 = vxpose.xlu0.b32.cont [2/16] %v3702, 128
  %3815 = vxpose.xlu0.b32.cont [3/16] %v3703, 128
  %3816 = vxpose.xlu0.b32.cont [4/16] %v3704, 128
  %3817 = vxpose.xlu0.b32.cont [5/16] %v3705, 128
  %3818 = vxpose.xlu0.b32.cont [6/16] %v3706, 128
  %3819 = vxpose.xlu0.b32.cont [7/16] %v3707, 128
  %3820 = vxpose.xlu0.b32.cont [8/16] %v3708, 128
  %3821 = vxpose.xlu0.b32.cont [9/16] %v3709, 128
  %3822 = vxpose.xlu0.b32.cont [10/16] %v3710, 128
  %3823 = vxpose.xlu0.b32.cont [11/16] %v3711, 128
  %3824 = vxpose.xlu0.b32.cont [12/16] %v3712, 128
  %3825 = vxpose.xlu0.b32.cont [13/16] %v3713, 128
  %3826 = vxpose.xlu0.b32.cont [14/16] %v3714, 128
  %3827 = vxpose.xlu0.b32.cont [15/16] %v3715, 128
  %3828 = vxpose.xlu0.b32.end [16/16] %v3716, 128
  %v3829 = vpop.trf.xlu0
  %v3830 = vpop.trf.xlu0
  %v3831 = vpop.trf.xlu0
  %v3832 = vpop.trf.xlu0
  %v3833 = vpop.trf.xlu0
  %v3834 = vpop.trf.xlu0
  %v3835 = vpop.trf.xlu0
  %v3836 = vpop.trf.xlu0
  %v3837 = vpop.trf.xlu0
  %v3838 = vpop.trf.xlu0
  %v3839 = vpop.trf.xlu0
  %v3840 = vpop.trf.xlu0
  %v3841 = vpop.trf.xlu0
  %v3842 = vpop.trf.xlu0
  %v3843 = vpop.trf.xlu0
  %v3844 = vpop.trf.xlu0
  %3845 = vst [vmem:[%s5] sm:$0xff] %v3733
  %3846 = vst [vmem:[%s5 + $0x8] sm:$0xff] %v3765
  %3847 = vst [vmem:[%s5 + $0x10] sm:$0xff] %v3734
  %3848 = vst [vmem:[%s5 + $0x18] sm:$0xff] %v3766
  %3849 = vst [vmem:[%s5 + $0x20] sm:$0xff] %v3735
  %3850 = vst [vmem:[%s5 + $0x28] sm:$0xff] %v3767
  %3851 = vst [vmem:[%s5 + $0x30] sm:$0xff] %v3736
  %3852 = vst [vmem:[%s5 + $0x38] sm:$0xff] %v3768
  %3853 = vst [vmem:[%s5 + $0x40] sm:$0xff] %v3797
  %3854 = vst [vmem:[%s5 + $0x48] sm:$0xff] %v3829
  %3855 = vst [vmem:[%s5 + $0x50] sm:$0xff] %v3798
  %3856 = vst [vmem:[%s5 + $0x58] sm:$0xff] %v3830
  %3857 = vst [vmem:[%s5 + $0x60] sm:$0xff] %v3799
  %3858 = vst [vmem:[%s5 + $0x68] sm:$0xff] %v3831
  %3859 = vst [vmem:[%s5 + $0x70] sm:$0xff] %v3800
  %3860 = vst [vmem:[%s5 + $0x78] sm:$0xff] %v3832
  // Predicated region
  $region22: #{protonet_forward.1} parent=0 // pred_check
    _
  $region23: #{protonet_forward.1} parent=0 // pred_check_branch
    %3862 = sbr.rel (0) target = $region25
  $region24: #{protonet_forward.1} parent=0 // pred_region
    _
  $region25: #{protonet_forward.1} parent=0 // pred_fallthru
    _
  // Predicated region
  $region26: #{protonet_forward.1} parent=0 // pred_check
    _
  $region27: #{protonet_forward.1} parent=0 // pred_check_branch
    %3864 = sbr.rel (0) target = $region29
  $region28: #{protonet_forward.1} parent=0 // pred_region
    _
  $region29: #{protonet_forward.1} parent=0 // pred_fallthru
    _

</llo_original>
